<compile_context>
chip_gen: v6e
topology: v6e:2x2x1
jax: 0.10.0
libtpu: 0.0.40
codegen_flags: <defaults>
</compile_context>

<pallas_src>
import functools

import jax
import jax.numpy as jnp
from jax.experimental import pallas as pl
from jax.experimental.pallas import tpu as pltpu


MATMUL_DTYPE = jnp.bfloat16          # MXU operand dtype; accumulation is float32
ACT_DTYPE = jnp.bfloat16             # inter-kernel activation dtype
LANE = 128                           # MLP hidden/output dims padded to this
VMEM_LIMIT_BYTES = 32 * 1024 * 1024  # explicit scoped-VMEM limit (v5e/v6e/v7x safe)
VMEM_TILE_BUDGET = VMEM_LIMIT_BYTES // 2
DUAL_CORE_MIN_ROWS = 1024            # >=2 row blocks beyond this (v7x has 2 TCs)


def _round_up(v, m):
    return -(-v // m) * m


def _round8(v):
    return max(8, (v // 8) * 8)


def _row_tile(rows, per_row_bytes, fixed_bytes):
    """VMEM-budget-driven row tile (multiple of 8).

    Uses roughly half the scoped VMEM limit for double-buffered activation
    tiles on top of the resident weights, and keeps >= 2 grid blocks once the
    row count is large so the "parallel" axis can shard across v7x's 2 TCs."""
    budget = max(VMEM_TILE_BUDGET - fixed_bytes, 64 * per_row_bytes)
    tm = _round8(budget // max(per_row_bytes, 1))
    if rows >= DUAL_CORE_MIN_ROWS:
        tm = min(tm, _round8(-(-rows // 2)))
    if tm >= rows:
        return rows, 1
    return tm, -(-rows // tm)


# ----------------------------------------------------------------------------
# Pallas kernels
# ----------------------------------------------------------------------------
def _dual_proj_kernel(x_ref, w_ref, b_ref, ol_ref, or_ref):
    # y = x @ [Wl | Wr] + [bl | br]   (fused GATv2 lin_l / lin_r, one MXU dot),
    # then split into two lane-dense bf16 outputs (no XLA slice copies).
    y = jnp.dot(x_ref[...].astype(MATMUL_DTYPE), w_ref[...],
                preferred_element_type=jnp.float32) + b_ref[...]
    hc = ol_ref.shape[-1]
    ol_ref[...] = y[:, :hc].astype(ol_ref.dtype)
    or_ref[...] = y[:, hc:].astype(or_ref.dtype)


def gat_dual_projection(x, w_lr, b_lr):
    """x:[R,Fin] @ [Wl|Wr] + [bl|br] -> (x_l, x_r), each [R,H*C] bf16."""
    rows, fin = x.shape
    fout2 = w_lr.shape[1]
    hc = fout2 // 2

    per_row = 2 * 4 * fin + 4 * fout2 + 2 * 2 * 2 * hc
    fixed = 2 * 2 * fin * fout2 + 2 * 4 * fout2
    tm, n_blk = _row_tile(rows, per_row, fixed)

    cost = pl.CostEstimate(
        flops=2 * rows * fin * fout2,
        transcendentals=0,
        bytes_accessed=int(rows * fin * x.dtype.itemsize + fin * fout2 * 2
                           + fout2 * 4 + 2 * rows * hc * 2))
    return pl.pallas_call(
        _dual_proj_kernel,
        grid=(n_blk,),
        out_shape=(jax.ShapeDtypeStruct((rows, hc), ACT_DTYPE),
                   jax.ShapeDtypeStruct((rows, hc), ACT_DTYPE)),
        in_specs=[
            pl.BlockSpec((tm, fin), lambda i: (i, 0)),
            # Constant-index weight/bias blocks: the Mosaic pipeliner does not
            # re-DMA blocks whose index does not change across the grid.
            pl.BlockSpec((fin, fout2), lambda i: (0, 0)),
            pl.BlockSpec((1, fout2), lambda i: (0, 0)),
        ],
        out_specs=(pl.BlockSpec((tm, hc), lambda i: (i, 0)),
                   pl.BlockSpec((tm, hc), lambda i: (i, 0))),
        compiler_params=pltpu.CompilerParams(
            dimension_semantics=("parallel",),
            vmem_limit_bytes=VMEM_LIMIT_BYTES),
        cost_estimate=cost,
    )(x, w_lr, b_lr)


def _fused_mlp_kernel(*refs, n_in, fout_valid, act_final, normalize):
    in_refs = refs[:n_in]
    w1_ref, b1_ref, w2_ref, bgb_ref, o_ref = refs[n_in:]

    # In-VMEM lane-axis concat of the loaded segments (the HBM concat of
    # BaseModel.forward never materialises), then ONE dot against the unsplit
    # W1 instead of n_in tiny-K MXU pushes.
    xcat = jnp.concatenate([r[...].astype(jnp.float32) for r in in_refs], axis=-1)
    h = jnp.dot(xcat.astype(MATMUL_DTYPE), w1_ref[...],
                preferred_element_type=jnp.float32)
    h = jnp.maximum(h + b1_ref[...], 0.0)                         # ReLU (f32)

    y = jnp.dot(h.astype(MATMUL_DTYPE), w2_ref[...],
                preferred_element_type=jnp.float32)
    bgb = bgb_ref[...]                                            # [3, fout_pad]: b2, gamma, beta
    y = y + bgb[0:1, :]
    if act_final:
        y = jnp.maximum(y, 0.0)
    if normalize:
        # LayerNorm (eps=1e-5) over the VALID lanes only; output is lane-padded
        # to 128 and pad lanes end up exactly 0 (gamma/beta pads are 0).
        lane = jax.lax.broadcasted_iota(jnp.int32, y.shape, 1)
        mask = (lane < fout_valid).astype(jnp.float32)
        inv_n = 1.0 / float(fout_valid)
        mean = jnp.sum(y * mask, axis=-1, keepdims=True) * inv_n
        yc = (y - mean) * mask
        var = jnp.sum(yc * yc, axis=-1, keepdims=True) * inv_n
        y = yc * jax.lax.rsqrt(var + 1e-5) * bgb[1:2, :] + bgb[2:3, :]
    o_ref[...] = y.astype(o_ref.dtype)


def fused_mlp(inputs, params, *, fout_valid, act_final=True, normalize=True):
    """Fused [x1|x2|...|xk] -> Linear -> ReLU -> Linear -> (ReLU) -> (LayerNorm).

    `inputs`: list of row-aligned [rows, f_k] arrays (some may carry zero lane
    padding; the matching W1 rows are zero).  Output is [rows, fout_pad] bf16
    with fout_pad a multiple of 128 (unmasked vst); pad lanes are exactly 0."""
    w1, b1, w2, bgb = params["w1"], params["b1"], params["w2"], params["bgb"]
    rows = inputs[0].shape[0]
    seg_w = tuple(int(a.shape[1]) for a in inputs)
    fin = sum(seg_w)
    fh_pad = w1.shape[1]
    fout_pad = w2.shape[1]
    assert w1.shape[0] == fin and bgb.shape[1] == fout_pad

    per_row = 2 * 4 * fin + 4 * (fin + fh_pad + fout_pad) + 2 * 2 * fout_pad
    fixed = 2 * 2 * (fin * fh_pad + fh_pad * fout_pad) + 4 * (fh_pad + 3 * fout_pad)
    tm, n_blk = _row_tile(rows, per_row, fixed)

    in_specs = [pl.BlockSpec((tm, w), lambda i: (i, 0)) for w in seg_w]
    # Constant-index weight/bias blocks (never re-DMAed across grid steps).
    in_specs += [
        pl.BlockSpec((fin, fh_pad), lambda i: (0, 0)),
        pl.BlockSpec((1, fh_pad), lambda i: (0, 0)),
        pl.BlockSpec((fh_pad, fout_pad), lambda i: (0, 0)),
        pl.BlockSpec((3, fout_pad), lambda i: (0, 0)),
    ]

    cost = pl.CostEstimate(
        flops=2 * rows * (fin * fh_pad + fh_pad * fout_pad),
        transcendentals=rows if normalize else 0,
        bytes_accessed=int(sum(a.size * a.dtype.itemsize for a in inputs)
                           + w1.size * 2 + w2.size * 2
                           + (b1.size + bgb.size) * 4 + rows * fout_pad * 2))

    kern = functools.partial(_fused_mlp_kernel, n_in=len(inputs),
                             fout_valid=fout_valid, act_final=act_final,
                             normalize=normalize)
    return pl.pallas_call(
        kern,
        grid=(n_blk,),
        out_shape=jax.ShapeDtypeStruct((rows, fout_pad), ACT_DTYPE),
        in_specs=in_specs,
        out_specs=pl.BlockSpec((tm, fout_pad), lambda i: (i, 0)),
        compiler_params=pltpu.CompilerParams(
            dimension_semantics=("parallel",),
            vmem_limit_bytes=VMEM_LIMIT_BYTES),
        cost_estimate=cost,
    )(*inputs, w1, b1, w2, bgb)


def mlp_reference(inputs, params, *, fout_valid, act_final=True, normalize=True):
    """Plain-XLA twin of the fused MLP, used for the GlobalModel where
    rows == num_graphs and a pallas dispatch would be pure latency."""
    w1, b1, w2, bgb = params["w1"], params["b1"], params["w2"], params["bgb"]
    xcat = jnp.concatenate([a.astype(jnp.float32) for a in inputs], axis=-1)
    h = jnp.dot(xcat.astype(MATMUL_DTYPE), w1, preferred_element_type=jnp.float32)
    h = jnp.maximum(h + b1, 0.0)
    y = jnp.dot(h.astype(MATMUL_DTYPE), w2, preferred_element_type=jnp.float32)
    y = y + bgb[0:1]
    if act_final:
        y = jnp.maximum(y, 0.0)
    if normalize:
        mask = (jnp.arange(y.shape[-1]) < fout_valid).astype(jnp.float32)
        mean = jnp.sum(y * mask, axis=-1, keepdims=True) / fout_valid
        yc = (y - mean) * mask
        var = jnp.sum(yc * yc, axis=-1, keepdims=True) / fout_valid
        y = yc * jax.lax.rsqrt(var + 1e-5) * bgb[1:2] + bgb[2:3]
    return y.astype(ACT_DTYPE)


# ----------------------------------------------------------------------------
# GATv2Conv (PyG semantics: add_self_loops=True, concat=True, negative_slope=0.2)
# ----------------------------------------------------------------------------
def gatv2_conv(x, edge_index, params, heads, out_ch, negative_slope=0.2):
    w_lr, b_lr, att, bias = params              # w_lr = [Wl | Wr], b_lr = [bl | br]
    n = x.shape[0]
    h, c = heads, out_ch
    hc = h * c

    xl2, xr2 = gat_dual_projection(x, w_lr, b_lr)   # bf16 [N, HC] each
    x_l = xl2.reshape(n, h, c)                      # source side (messages)
    x_r = xr2.reshape(n, h, c)                      # target side

    # input edge list has no self loops; PyG removes + re-adds them -> append
    loop = jnp.arange(n, dtype=edge_index.dtype)
    src = jnp.concatenate([edge_index[0], loop])
    dst = jnp.concatenate([edge_index[1], loop])

    # TODO(synk): per-edge gather / softmax / scatter-add should become a
    #             dst-sorted CSR PrefetchScalarGridSpec kernel at scale.
    x_j = x_l[src].astype(jnp.float32)              # [E', H, C]
    x_i = x_r[dst].astype(jnp.float32)
    e = x_i + x_j
    e = jnp.where(e > 0, e, negative_slope * e)     # LeakyReLU
    alpha = jnp.sum(e * att[None, :, :], axis=-1)   # [E', H]

    # segment softmax over destination node (self-loops guarantee >=1 edge/node)
    amax = jax.ops.segment_max(alpha, dst, num_segments=n)
    alpha = jnp.exp(alpha - amax[dst])
    denom = jax.ops.segment_sum(alpha, dst, num_segments=n)
    alpha = alpha / (denom[dst] + 1e-16)

    msg = x_j * alpha[:, :, None]
    out = jax.ops.segment_sum(msg, dst, num_segments=n)   # [N, H, C]
    return out.reshape(n, hc) + bias[None, :]              # concat heads + bias


def gat_encoder(x, edge_index, batch, num_graphs, gat_params, layer_dims):
    # GATEncoder.forward only applies MessagePassing layers; the ReLU modules
    # in its ModuleList are skipped by the isinstance check -> exact repro.
    h = x
    for p, (out_ch, heads) in zip(gat_params, layer_dims):
        h = gatv2_conv(h, edge_index, p, heads=heads, out_ch=out_ch)
    return jax.ops.segment_sum(h, batch, num_segments=num_graphs)  # global_add_pool


# ----------------------------------------------------------------------------
# GraphNetwork forward (NodeModel -> EdgeModel -> GlobalModel)
# ----------------------------------------------------------------------------
@functools.partial(jax.jit,
                   static_argnames=("num_graphs", "gat_layer_dims", "out_dims"))
def graph_network(x, edge_attr, edge_index, batch, params, *,
                  num_graphs, gat_layer_dims, out_dims):
    node_out, edge_out, glob_out = out_dims
    row, col = edge_index[0], edge_index[1]
    n = x.shape[0]

    # graph has no precomputed .u -> compute global state with the GATEncoder
    u = gat_encoder(x, edge_index, batch, num_graphs,
                    params["gat"], gat_layer_dims)

    # --- NodeModel: [x, edges->node(col), edges->node(row), u->nodes] ---------
    recv_to_node = jax.ops.segment_sum(edge_attr, col, num_segments=n)
    send_to_node = jax.ops.segment_sum(edge_attr, row, num_segments=n)
    u_to_nodes = u[batch]
    x_pad = fused_mlp([x, recv_to_node, send_to_node, u_to_nodes],
                      params["node_mlp"], fout_valid=node_out)     # bf16 [N, 128]

    # --- EdgeModel: [edge_attr, x_new[row], x_new[col], u->edges] -------------
    edge_batch = batch[row]
    u_to_edges = u[edge_batch]
    e_pad = fused_mlp([edge_attr, x_pad[row], x_pad[col], u_to_edges],
                      params["edge_mlp"], fout_valid=edge_out)     # bf16 [E, 128]

    # --- GlobalModel: [u, sum(x_new per graph), sum(edge_new per graph)] ------
    # rows == num_graphs: plain XLA (a pallas dispatch is pure latency here).
    node_aggr = jax.ops.segment_sum(x_pad.astype(jnp.float32), batch,
                                    num_segments=num_graphs)
    edge_aggr = jax.ops.segment_sum(e_pad.astype(jnp.float32), edge_batch,
                                    num_segments=num_graphs)
    u_pad = mlp_reference([u, node_aggr, edge_aggr], params["global_mlp"],
                          fout_valid=glob_out)

    # strip the lane padding / cast back to f32 once at the very end
    return (x_pad[:, :node_out].astype(jnp.float32),
            e_pad[:, :edge_out].astype(jnp.float32),
            u_pad[:, :glob_out].astype(jnp.float32))


# ----------------------------------------------------------------------------
# Deterministic parameter initialisation
# ----------------------------------------------------------------------------
def _glorot(key, shape):
    limit = jnp.sqrt(6.0 / (shape[0] + shape[1]))
    return jax.random.uniform(key, shape, jnp.float32, -limit, limit)


def init_mlp(key, seg_specs, fh, fout):
    """seg_specs: tuple of (valid_width, stored_width) per input segment.

    W1 rows at lane-pad positions are zero; W1/W2/biases are lane-padded to a
    multiple of 128 so the kernel output is lane-dense.  (At production sizes
    fh / fout should be sized >=128 (v5e) or >=256 (v6e/v7x) natively.)"""
    fh_pad = _round_up(fh, LANE)
    fout_pad = _round_up(fout, LANE)
    keys = jax.random.split(key, len(seg_specs) + 1)
    blocks = []
    for k, (valid, stored) in zip(keys[:-1], seg_specs):
        blk = jnp.zeros((stored, fh_pad), jnp.float32)
        blk = blk.at[:valid, :fh].set(_glorot(k, (valid, fh)))
        blocks.append(blk)
    w1 = jnp.concatenate(blocks, axis=0).astype(MATMUL_DTYPE)
    w2 = jnp.zeros((fh_pad, fout_pad), jnp.float32)
    w2 = w2.at[:fh, :fout].set(_glorot(keys[-1], (fh, fout))).astype(MATMUL_DTYPE)
    b1 = jnp.zeros((1, fh_pad), jnp.float32)
    # packed [b2; gamma; beta], one VMEM tile; gamma/beta pad lanes stay 0
    bgb = jnp.zeros((3, fout_pad), jnp.float32).at[1, :fout].set(1.0)
    return {"w1": w1, "b1": b1, "w2": w2, "bgb": bgb}


def init_gat(key, fin, out_ch, heads):
    k1, k2, k3 = jax.random.split(key, 3)
    hc = heads * out_ch
    wl = _glorot(k1, (fin, hc))
    wr = _glorot(k2, (fin, hc))
    w_lr = jnp.concatenate([wl, wr], axis=1).astype(MATMUL_DTYPE)  # fused lin_l|lin_r
    b_lr = jnp.zeros((1, 2 * hc), jnp.float32)
    att = _glorot(k3, (heads, out_ch))
    bias = jnp.zeros((hc,), jnp.float32)
    return (w_lr, b_lr, att, bias)


# ----------------------------------------------------------------------------
if __name__ == "__main__":
    key = jax.random.PRNGKey(0)

    # small synthetic batched graph: 2 graphs x 5 nodes, 6 directed edges each
    N, B = 10, 2
    F_X, F_E = 8, 6                           # node / edge feature dims
    GAT_HIDD, HEADS, GAT_OUT = 4, 3, 5        # GATEncoder config
    HIDD = 32
    NODE_OUT, EDGE_OUT, GLOB_OUT = 16, 12, 8
    NODE_PAD = _round_up(NODE_OUT, LANE)
    EDGE_PAD = _round_up(EDGE_OUT, LANE)

    kx, ke, kg0, kg1, kg2, kg3, kn, kedge, kglob = jax.random.split(key, 9)
    x = jax.random.normal(kx, (N, F_X), jnp.float32)
    src0 = jnp.array([0, 1, 2, 3, 4, 0], jnp.int32)
    dst0 = jnp.array([1, 2, 3, 4, 0, 2], jnp.int32)
    edge_index = jnp.stack([jnp.concatenate([src0, src0 + 5]),
                            jnp.concatenate([dst0, dst0 + 5])])   # [2, 12]
    E = edge_index.shape[1]
    edge_attr = jax.random.normal(ke, (E, F_E), jnp.float32)
    batch = jnp.array([0] * 5 + [1] * 5, jnp.int32)

    # GATEncoder: GATv2(8->4,h3), GATv2(12->4,h3), GATv2(12->4,h3), GATv2(12->5,h1)
    gat_layer_dims = ((GAT_HIDD, HEADS), (GAT_HIDD, HEADS), (GAT_HIDD, HEADS),
                      (GAT_OUT, 1))
    gat_params = [
        init_gat(kg0, F_X, GAT_HIDD, HEADS),
        init_gat(kg1, GAT_HIDD * HEADS, GAT_HIDD, HEADS),
        init_gat(kg2, GAT_HIDD * HEADS, GAT_HIDD, HEADS),
        init_gat(kg3, GAT_HIDD * HEADS, GAT_OUT, 1),
    ]

    params = {
        "gat": gat_params,
        # NodeModel  segments: [x, recv_edges, send_edges, u_to_nodes]
        "node_mlp": init_mlp(kn, ((F_X, F_X), (F_E, F_E), (F_E, F_E),
                                  (GAT_OUT, GAT_OUT)), HIDD, NODE_OUT),
        # EdgeModel  segments: [edge_attr, x_new[row] (lane-padded), x_new[col], u_to_edges]
        "edge_mlp": init_mlp(kedge, ((F_E, F_E), (NODE_OUT, NODE_PAD),
                                     (NODE_OUT, NODE_PAD), (GAT_OUT, GAT_OUT)),
                             HIDD, EDGE_OUT),
        # GlobalModel segments: [u, node_aggr (lane-padded), edge_aggr (lane-padded)]
        "global_mlp": init_mlp(kglob, ((GAT_OUT, GAT_OUT), (NODE_OUT, NODE_PAD),
                                       (EDGE_OUT, EDGE_PAD)), HIDD, GLOB_OUT),
    }

    x_new, e_new, u_new = graph_network(
        x, edge_attr, edge_index, batch, params,
        num_graphs=B, gat_layer_dims=gat_layer_dims,
        out_dims=(NODE_OUT, EDGE_OUT, GLOB_OUT))
    jax.block_until_ready((x_new, e_new, u_new))

    assert x_new.shape == (N, NODE_OUT)
    assert e_new.shape == (E, EDGE_OUT)
    assert u_new.shape == (B, GLOB_OUT)
    assert bool(jnp.all(jnp.isfinite(x_new)) & jnp.all(jnp.isfinite(e_new))
                & jnp.all(jnp.isfinite(u_new)))
    print("KERNEL_OK")
</pallas_src>

<mosaic_0001>
module attributes {stable_mosaic.version = 11 : i64} {
  func.func @_dual_proj_kernel(%arg0: i32, %arg1: memref<10x8xf32, #tpu.memory_space<vmem>>, %arg2: memref<8x24xbf16, #tpu.memory_space<vmem>>, %arg3: memref<1x24xf32, #tpu.memory_space<vmem>>, %arg4: memref<10x12xbf16, #tpu.memory_space<vmem>>, %arg5: memref<10x12xbf16, #tpu.memory_space<vmem>>) attributes {dimension_semantics = [#tpu.dimension_semantics<parallel>], iteration_bounds = array<i64: 1>, scalar_prefetch = 0 : i64, scratch_operands = 0 : i64, tpu.core_type = #tpu.core_type<tc>, window_params = [{transform_indices = @transform_0, window_bounds = array<i64: 10, 8>}, {pipeline_mode = #tpu.pipeline_mode<synchronous>, transform_indices = @transform_1, window_bounds = array<i64: 8, 24>}, {pipeline_mode = #tpu.pipeline_mode<synchronous>, transform_indices = @transform_2, window_bounds = array<i64: 1, 24>}, {transform_indices = @transform_3, window_bounds = array<i64: 10, 12>}, {transform_indices = @transform_4, window_bounds = array<i64: 10, 12>}]} {
    %c0 = arith.constant 0 : index
    %c0_0 = arith.constant 0 : index
    %0 = vector.load %arg1[%c0, %c0_0] : memref<10x8xf32, #tpu.memory_space<vmem>>, vector<10x8xf32>
    %1 = arith.truncf %0 : vector<10x8xf32> to vector<10x8xbf16>
    %c0_1 = arith.constant 0 : index
    %c0_2 = arith.constant 0 : index
    %2 = vector.load %arg2[%c0_1, %c0_2] : memref<8x24xbf16, #tpu.memory_space<vmem>>, vector<8x24xbf16>
    %cst = arith.constant dense<0.000000e+00> : vector<10x24xf32>
    %3 = tpu.matmul %1, %2, %cst {dimension_numbers = #tpu.dot_dimension_numbers<[1], [0], [0], [1], [0, 0, 1, 1], [], []>} : vector<10x8xbf16>, vector<8x24xbf16>, vector<10x24xf32> -> vector<10x24xf32>
    %c0_3 = arith.constant 0 : index
    %c0_4 = arith.constant 0 : index
    %4 = vector.load %arg3[%c0_3, %c0_4] : memref<1x24xf32, #tpu.memory_space<vmem>>, vector<1x24xf32>
    %5 = vector.broadcast %4 : vector<1x24xf32> to vector<10x24xf32>
    %6 = arith.addf %3, %5 : vector<10x24xf32>
    %7 = vector.extract_strided_slice %6 {offsets = [0, 0], sizes = [10, 12], strides = [1, 1]} : vector<10x24xf32> to vector<10x12xf32>
    %8 = arith.truncf %7 : vector<10x12xf32> to vector<10x12xbf16>
    %c0_5 = arith.constant 0 : index
    %c0_6 = arith.constant 0 : index
    %9 = vector.load %arg4[%c0_5, %c0_6] : memref<10x12xbf16, #tpu.memory_space<vmem>>, vector<10x12xbf16>
    tpu.vector_store %arg4[%c0_5, %c0_6], %8 {strides = array<i32>} : memref<10x12xbf16, #tpu.memory_space<vmem>>, vector<10x12xbf16>,
    %10 = vector.extract_strided_slice %6 {offsets = [0, 12], sizes = [10, 12], strides = [1, 1]} : vector<10x24xf32> to vector<10x12xf32>
    %11 = arith.truncf %10 : vector<10x12xf32> to vector<10x12xbf16>
    %c0_7 = arith.constant 0 : index
    %c0_8 = arith.constant 0 : index
    %12 = vector.load %arg5[%c0_7, %c0_8] : memref<10x12xbf16, #tpu.memory_space<vmem>>, vector<10x12xbf16>
    tpu.vector_store %arg5[%c0_7, %c0_8], %11 {strides = array<i32>} : memref<10x12xbf16, #tpu.memory_space<vmem>>, vector<10x12xbf16>,
    return
  }
  func.func @transform_0(%arg0: i32) -> (i32, i32) {
    %c0_i32 = arith.constant 0 : i32
    %c0_i32_0 = arith.constant 0 : i32
    return %arg0, %c0_i32 : i32, i32
  }
  func.func @transform_1(%arg0: i32) -> (i32, i32) {
    %c0_i32 = arith.constant 0 : i32
    %c0_i32_0 = arith.constant 0 : i32
    %c0_i32_1 = arith.constant 0 : i32
    return %c0_i32, %c0_i32_0 : i32, i32
  }
  func.func @transform_2(%arg0: i32) -> (i32, i32) {
    %c0_i32 = arith.constant 0 : i32
    %c0_i32_0 = arith.constant 0 : i32
    %c0_i32_1 = arith.constant 0 : i32
    return %c0_i32, %c0_i32_0 : i32, i32
  }
  func.func @transform_3(%arg0: i32) -> (i32, i32) {
    %c0_i32 = arith.constant 0 : i32
    %c0_i32_0 = arith.constant 0 : i32
    return %arg0, %c0_i32 : i32, i32
  }
  func.func @transform_4(%arg0: i32) -> (i32, i32) {
    %c0_i32 = arith.constant 0 : i32
    %c0_i32_0 = arith.constant 0 : i32
    return %arg0, %c0_i32 : i32, i32
  }
}

module attributes {stable_mosaic.version = 11 : i64} {
  func.func @_dual_proj_kernel(%arg0: i32, %arg1: memref<10x12xf32, #tpu.memory_space<vmem>>, %arg2: memref<12x24xbf16, #tpu.memory_space<vmem>>, %arg3: memref<1x24xf32, #tpu.memory_space<vmem>>, %arg4: memref<10x12xbf16, #tpu.memory_space<vmem>>, %arg5: memref<10x12xbf16, #tpu.memory_space<vmem>>) attributes {dimension_semantics = [#tpu.dimension_semantics<parallel>], iteration_bounds = array<i64: 1>, scalar_prefetch = 0 : i64, scratch_operands = 0 : i64, tpu.core_type = #tpu.core_type<tc>, window_params = [{transform_indices = @transform_0, window_bounds = array<i64: 10, 12>}, {pipeline_mode = #tpu.pipeline_mode<synchronous>, transform_indices = @transform_1, window_bounds = array<i64: 12, 24>}, {pipeline_mode = #tpu.pipeline_mode<synchronous>, transform_indices = @transform_2, window_bounds = array<i64: 1, 24>}, {transform_indices = @transform_3, window_bounds = array<i64: 10, 12>}, {transform_indices = @transform_4, window_bounds = array<i64: 10, 12>}]} {
    %c0 = arith.constant 0 : index
    %c0_0 = arith.constant 0 : index
    %0 = vector.load %arg1[%c0, %c0_0] : memref<10x12xf32, #tpu.memory_space<vmem>>, vector<10x12xf32>
    %1 = arith.truncf %0 : vector<10x12xf32> to vector<10x12xbf16>
    %c0_1 = arith.constant 0 : index
    %c0_2 = arith.constant 0 : index
    %2 = vector.load %arg2[%c0_1, %c0_2] : memref<12x24xbf16, #tpu.memory_space<vmem>>, vector<12x24xbf16>
    %cst = arith.constant dense<0.000000e+00> : vector<10x24xf32>
    %3 = tpu.matmul %1, %2, %cst {dimension_numbers = #tpu.dot_dimension_numbers<[1], [0], [0], [1], [0, 0, 1, 1], [], []>} : vector<10x12xbf16>, vector<12x24xbf16>, vector<10x24xf32> -> vector<10x24xf32>
    %c0_3 = arith.constant 0 : index
    %c0_4 = arith.constant 0 : index
    %4 = vector.load %arg3[%c0_3, %c0_4] : memref<1x24xf32, #tpu.memory_space<vmem>>, vector<1x24xf32>
    %5 = vector.broadcast %4 : vector<1x24xf32> to vector<10x24xf32>
    %6 = arith.addf %3, %5 : vector<10x24xf32>
    %7 = vector.extract_strided_slice %6 {offsets = [0, 0], sizes = [10, 12], strides = [1, 1]} : vector<10x24xf32> to vector<10x12xf32>
    %8 = arith.truncf %7 : vector<10x12xf32> to vector<10x12xbf16>
    %c0_5 = arith.constant 0 : index
    %c0_6 = arith.constant 0 : index
    %9 = vector.load %arg4[%c0_5, %c0_6] : memref<10x12xbf16, #tpu.memory_space<vmem>>, vector<10x12xbf16>
    tpu.vector_store %arg4[%c0_5, %c0_6], %8 {strides = array<i32>} : memref<10x12xbf16, #tpu.memory_space<vmem>>, vector<10x12xbf16>,
    %10 = vector.extract_strided_slice %6 {offsets = [0, 12], sizes = [10, 12], strides = [1, 1]} : vector<10x24xf32> to vector<10x12xf32>
    %11 = arith.truncf %10 : vector<10x12xf32> to vector<10x12xbf16>
    %c0_7 = arith.constant 0 : index
    %c0_8 = arith.constant 0 : index
    %12 = vector.load %arg5[%c0_7, %c0_8] : memref<10x12xbf16, #tpu.memory_space<vmem>>, vector<10x12xbf16>
    tpu.vector_store %arg5[%c0_7, %c0_8], %11 {strides = array<i32>} : memref<10x12xbf16, #tpu.memory_space<vmem>>, vector<10x12xbf16>,
    return
  }
  func.func @transform_0(%arg0: i32) -> (i32, i32) {
    %c0_i32 = arith.constant 0 : i32
    %c0_i32_0 = arith.constant 0 : i32
    return %arg0, %c0_i32 : i32, i32
  }
  func.func @transform_1(%arg0: i32) -> (i32, i32) {
    %c0_i32 = arith.constant 0 : i32
    %c0_i32_0 = arith.constant 0 : i32
    %c0_i32_1 = arith.constant 0 : i32
    return %c0_i32, %c0_i32_0 : i32, i32
  }
  func.func @transform_2(%arg0: i32) -> (i32, i32) {
    %c0_i32 = arith.constant 0 : i32
    %c0_i32_0 = arith.constant 0 : i32
    %c0_i32_1 = arith.constant 0 : i32
    return %c0_i32, %c0_i32_0 : i32, i32
  }
  func.func @transform_3(%arg0: i32) -> (i32, i32) {
    %c0_i32 = arith.constant 0 : i32
    %c0_i32_0 = arith.constant 0 : i32
    return %arg0, %c0_i32 : i32, i32
  }
  func.func @transform_4(%arg0: i32) -> (i32, i32) {
    %c0_i32 = arith.constant 0 : i32
    %c0_i32_0 = arith.constant 0 : i32
    return %arg0, %c0_i32 : i32, i32
  }
}

module attributes {stable_mosaic.version = 11 : i64} {
  func.func @_dual_proj_kernel(%arg0: i32, %arg1: memref<10x12xf32, #tpu.memory_space<vmem>>, %arg2: memref<12x10xbf16, #tpu.memory_space<vmem>>, %arg3: memref<1x10xf32, #tpu.memory_space<vmem>>, %arg4: memref<10x5xbf16, #tpu.memory_space<vmem>>, %arg5: memref<10x5xbf16, #tpu.memory_space<vmem>>) attributes {dimension_semantics = [#tpu.dimension_semantics<parallel>], iteration_bounds = array<i64: 1>, scalar_prefetch = 0 : i64, scratch_operands = 0 : i64, tpu.core_type = #tpu.core_type<tc>, window_params = [{transform_indices = @transform_0, window_bounds = array<i64: 10, 12>}, {pipeline_mode = #tpu.pipeline_mode<synchronous>, transform_indices = @transform_1, window_bounds = array<i64: 12, 10>}, {pipeline_mode = #tpu.pipeline_mode<synchronous>, transform_indices = @transform_2, window_bounds = array<i64: 1, 10>}, {transform_indices = @transform_3, window_bounds = array<i64: 10, 5>}, {transform_indices = @transform_4, window_bounds = array<i64: 10, 5>}]} {
    %c0 = arith.constant 0 : index
    %c0_0 = arith.constant 0 : index
    %0 = vector.load %arg1[%c0, %c0_0] : memref<10x12xf32, #tpu.memory_space<vmem>>, vector<10x12xf32>
    %1 = arith.truncf %0 : vector<10x12xf32> to vector<10x12xbf16>
    %c0_1 = arith.constant 0 : index
    %c0_2 = arith.constant 0 : index
    %2 = vector.load %arg2[%c0_1, %c0_2] : memref<12x10xbf16, #tpu.memory_space<vmem>>, vector<12x10xbf16>
    %cst = arith.constant dense<0.000000e+00> : vector<10x10xf32>
    %3 = tpu.matmul %1, %2, %cst {dimension_numbers = #tpu.dot_dimension_numbers<[1], [0], [0], [1], [0, 0, 1, 1], [], []>} : vector<10x12xbf16>, vector<12x10xbf16>, vector<10x10xf32> -> vector<10x10xf32>
    %c0_3 = arith.constant 0 : index
    %c0_4 = arith.constant 0 : index
    %4 = vector.load %arg3[%c0_3, %c0_4] : memref<1x10xf32, #tpu.memory_space<vmem>>, vector<1x10xf32>
    %5 = vector.broadcast %4 : vector<1x10xf32> to vector<10x10xf32>
    %6 = arith.addf %3, %5 : vector<10x10xf32>
    %7 = vector.extract_strided_slice %6 {offsets = [0, 0], sizes = [10, 5], strides = [1, 1]} : vector<10x10xf32> to vector<10x5xf32>
    %8 = arith.truncf %7 : vector<10x5xf32> to vector<10x5xbf16>
    %c0_5 = arith.constant 0 : index
    %c0_6 = arith.constant 0 : index
    %9 = vector.load %arg4[%c0_5, %c0_6] : memref<10x5xbf16, #tpu.memory_space<vmem>>, vector<10x5xbf16>
    tpu.vector_store %arg4[%c0_5, %c0_6], %8 {strides = array<i32>} : memref<10x5xbf16, #tpu.memory_space<vmem>>, vector<10x5xbf16>,
    %10 = vector.extract_strided_slice %6 {offsets = [0, 5], sizes = [10, 5], strides = [1, 1]} : vector<10x10xf32> to vector<10x5xf32>
    %11 = arith.truncf %10 : vector<10x5xf32> to vector<10x5xbf16>
    %c0_7 = arith.constant 0 : index
    %c0_8 = arith.constant 0 : index
    %12 = vector.load %arg5[%c0_7, %c0_8] : memref<10x5xbf16, #tpu.memory_space<vmem>>, vector<10x5xbf16>
    tpu.vector_store %arg5[%c0_7, %c0_8], %11 {strides = array<i32>} : memref<10x5xbf16, #tpu.memory_space<vmem>>, vector<10x5xbf16>,
    return
  }
  func.func @transform_0(%arg0: i32) -> (i32, i32) {
    %c0_i32 = arith.constant 0 : i32
    %c0_i32_0 = arith.constant 0 : i32
    return %arg0, %c0_i32 : i32, i32
  }
  func.func @transform_1(%arg0: i32) -> (i32, i32) {
    %c0_i32 = arith.constant 0 : i32
    %c0_i32_0 = arith.constant 0 : i32
    %c0_i32_1 = arith.constant 0 : i32
    return %c0_i32, %c0_i32_0 : i32, i32
  }
  func.func @transform_2(%arg0: i32) -> (i32, i32) {
    %c0_i32 = arith.constant 0 : i32
    %c0_i32_0 = arith.constant 0 : i32
    %c0_i32_1 = arith.constant 0 : i32
    return %c0_i32, %c0_i32_0 : i32, i32
  }
  func.func @transform_3(%arg0: i32) -> (i32, i32) {
    %c0_i32 = arith.constant 0 : i32
    %c0_i32_0 = arith.constant 0 : i32
    return %arg0, %c0_i32 : i32, i32
  }
  func.func @transform_4(%arg0: i32) -> (i32, i32) {
    %c0_i32 = arith.constant 0 : i32
    %c0_i32_0 = arith.constant 0 : i32
    return %arg0, %c0_i32 : i32, i32
  }
}

module attributes {stable_mosaic.version = 11 : i64} {
  func.func @_fused_mlp_kernel(%arg0: i32, %arg1: memref<10x8xf32, #tpu.memory_space<vmem>>, %arg2: memref<10x6xf32, #tpu.memory_space<vmem>>, %arg3: memref<10x6xf32, #tpu.memory_space<vmem>>, %arg4: memref<10x5xf32, #tpu.memory_space<vmem>>, %arg5: memref<25x128xbf16, #tpu.memory_space<vmem>>, %arg6: memref<1x128xf32, #tpu.memory_space<vmem>>, %arg7: memref<128x128xbf16, #tpu.memory_space<vmem>>, %arg8: memref<3x128xf32, #tpu.memory_space<vmem>>, %arg9: memref<10x128xbf16, #tpu.memory_space<vmem>>) attributes {dimension_semantics = [#tpu.dimension_semantics<parallel>], iteration_bounds = array<i64: 1>, scalar_prefetch = 0 : i64, scratch_operands = 0 : i64, tpu.core_type = #tpu.core_type<tc>, window_params = [{transform_indices = @transform_0, window_bounds = array<i64: 10, 8>}, {transform_indices = @transform_1, window_bounds = array<i64: 10, 6>}, {transform_indices = @transform_2, window_bounds = array<i64: 10, 6>}, {transform_indices = @transform_3, window_bounds = array<i64: 10, 5>}, {pipeline_mode = #tpu.pipeline_mode<synchronous>, transform_indices = @transform_4, window_bounds = array<i64: 25, 128>}, {pipeline_mode = #tpu.pipeline_mode<synchronous>, transform_indices = @transform_5, window_bounds = array<i64: 1, 128>}, {pipeline_mode = #tpu.pipeline_mode<synchronous>, transform_indices = @transform_6, window_bounds = array<i64: 128, 128>}, {pipeline_mode = #tpu.pipeline_mode<synchronous>, transform_indices = @transform_7, window_bounds = array<i64: 3, 128>}, {transform_indices = @transform_8, window_bounds = array<i64: 10, 128>}]} {
    %c0 = arith.constant 0 : index
    %c0_0 = arith.constant 0 : index
    %0 = vector.load %arg1[%c0, %c0_0] : memref<10x8xf32, #tpu.memory_space<vmem>>, vector<10x8xf32>
    %c0_1 = arith.constant 0 : index
    %c0_2 = arith.constant 0 : index
    %1 = vector.load %arg2[%c0_1, %c0_2] : memref<10x6xf32, #tpu.memory_space<vmem>>, vector<10x6xf32>
    %c0_3 = arith.constant 0 : index
    %c0_4 = arith.constant 0 : index
    %2 = vector.load %arg3[%c0_3, %c0_4] : memref<10x6xf32, #tpu.memory_space<vmem>>, vector<10x6xf32>
    %c0_5 = arith.constant 0 : index
    %c0_6 = arith.constant 0 : index
    %3 = vector.load %arg4[%c0_5, %c0_6] : memref<10x5xf32, #tpu.memory_space<vmem>>, vector<10x5xf32>
    %4 = tpu.concatenate %0, %1, %2, %3 in 1 : vector<10x8xf32>, vector<10x6xf32>, vector<10x6xf32>, vector<10x5xf32> -> vector<10x25xf32>
    %5 = arith.truncf %4 : vector<10x25xf32> to vector<10x25xbf16>
    %c0_7 = arith.constant 0 : index
    %c0_8 = arith.constant 0 : index
    %6 = vector.load %arg5[%c0_7, %c0_8] : memref<25x128xbf16, #tpu.memory_space<vmem>>, vector<25x128xbf16>
    %cst = arith.constant dense<0.000000e+00> : vector<10x128xf32>
    %7 = tpu.matmul %5, %6, %cst {dimension_numbers = #tpu.dot_dimension_numbers<[1], [0], [0], [1], [0, 0, 1, 1], [], []>} : vector<10x25xbf16>, vector<25x128xbf16>, vector<10x128xf32> -> vector<10x128xf32>
    %c0_9 = arith.constant 0 : index
    %c0_10 = arith.constant 0 : index
    %8 = vector.load %arg6[%c0_9, %c0_10] : memref<1x128xf32, #tpu.memory_space<vmem>>, vector<1x128xf32>
    %9 = vector.broadcast %8 : vector<1x128xf32> to vector<10x128xf32>
    %10 = arith.addf %7, %9 : vector<10x128xf32>
    %cst_11 = arith.constant 0.000000e+00 : f32
    %11 = vector.broadcast %cst_11 : f32 to vector<10x128xf32>
    %12 = arith.maximumf %10, %11 : vector<10x128xf32>
    %13 = arith.truncf %12 : vector<10x128xf32> to vector<10x128xbf16>
    %c0_12 = arith.constant 0 : index
    %c0_13 = arith.constant 0 : index
    %14 = vector.load %arg7[%c0_12, %c0_13] : memref<128x128xbf16, #tpu.memory_space<vmem>>, vector<128x128xbf16>
    %cst_14 = arith.constant dense<0.000000e+00> : vector<10x128xf32>
    %15 = tpu.matmul %13, %14, %cst_14 {dimension_numbers = #tpu.dot_dimension_numbers<[1], [0], [0], [1], [0, 0, 1, 1], [], []>} : vector<10x128xbf16>, vector<128x128xbf16>, vector<10x128xf32> -> vector<10x128xf32>
    %c0_15 = arith.constant 0 : index
    %c0_16 = arith.constant 0 : index
    %16 = vector.load %arg8[%c0_15, %c0_16] : memref<3x128xf32, #tpu.memory_space<vmem>>, vector<3x128xf32>
    %17 = vector.extract_strided_slice %16 {offsets = [0, 0], sizes = [1, 128], strides = [1, 1]} : vector<3x128xf32> to vector<1x128xf32>
    %18 = vector.broadcast %17 : vector<1x128xf32> to vector<10x128xf32>
    %19 = arith.addf %15, %18 : vector<10x128xf32>
    %cst_17 = arith.constant 0.000000e+00 : f32
    %20 = vector.broadcast %cst_17 : f32 to vector<10x128xf32>
    %21 = arith.maximumf %19, %20 : vector<10x128xf32>
    %22 = tpu.iota {dimensions = array<i32: 1>} : vector<10x128xi32>
    %c16_i32 = arith.constant 16 : i32
    %23 = vector.broadcast %c16_i32 : i32 to vector<10x128xi32>
    %24 = arith.cmpi slt, %22, %23 : vector<10x128xi32>
    %25 = arith.extui %24 : vector<10x128xi1> to vector<10x128xi32>
    %26 = arith.sitofp %25 : vector<10x128xi32> to vector<10x128xf32>
    %27 = arith.mulf %21, %26 : vector<10x128xf32>
    %cst_18 = arith.constant dense<0.000000e+00> : vector<10xf32>
    %28 = vector.multi_reduction <add>, %27, %cst_18 [1] : vector<10x128xf32> to vector<10xf32>
    %29 = vector.shape_cast %28 : vector<10xf32> to vector<10x1xf32>
    %cst_19 = arith.constant 6.250000e-02 : f32
    %30 = vector.broadcast %cst_19 : f32 to vector<10x1xf32>
    %31 = arith.mulf %29, %30 : vector<10x1xf32>
    %32 = vector.broadcast %31 : vector<10x1xf32> to vector<10x128xf32>
    %33 = arith.subf %21, %32 : vector<10x128xf32>
    %34 = arith.mulf %33, %26 : vector<10x128xf32>
    %35 = arith.mulf %34, %34 : vector<10x128xf32>
    %cst_20 = arith.constant dense<0.000000e+00> : vector<10xf32>
    %36 = vector.multi_reduction <add>, %35, %cst_20 [1] : vector<10x128xf32> to vector<10xf32>
    %37 = vector.shape_cast %36 : vector<10xf32> to vector<10x1xf32>
    %cst_21 = arith.constant 6.250000e-02 : f32
    %38 = vector.broadcast %cst_21 : f32 to vector<10x1xf32>
    %39 = arith.mulf %37, %38 : vector<10x1xf32>
    %cst_22 = arith.constant 9.99999974E-6 : f32
    %40 = vector.broadcast %cst_22 : f32 to vector<10x1xf32>
    %41 = arith.addf %39, %40 : vector<10x1xf32>
    %42 = math.rsqrt %41 : vector<10x1xf32>
    %43 = vector.broadcast %42 : vector<10x1xf32> to vector<10x128xf32>
    %44 = arith.mulf %34, %43 : vector<10x128xf32>
    %45 = vector.extract_strided_slice %16 {offsets = [1, 0], sizes = [1, 128], strides = [1, 1]} : vector<3x128xf32> to vector<1x128xf32>
    %46 = vector.broadcast %45 : vector<1x128xf32> to vector<10x128xf32>
    %47 = arith.mulf %44, %46 : vector<10x128xf32>
    %48 = vector.extract_strided_slice %16 {offsets = [2, 0], sizes = [1, 128], strides = [1, 1]} : vector<3x128xf32> to vector<1x128xf32>
    %49 = vector.broadcast %48 : vector<1x128xf32> to vector<10x128xf32>
    %50 = arith.addf %47, %49 : vector<10x128xf32>
    %51 = arith.truncf %50 : vector<10x128xf32> to vector<10x128xbf16>
    %c0_23 = arith.constant 0 : index
    %c0_24 = arith.constant 0 : index
    %52 = vector.load %arg9[%c0_23, %c0_24] : memref<10x128xbf16, #tpu.memory_space<vmem>>, vector<10x128xbf16>
    tpu.vector_store %arg9[%c0_23, %c0_24], %51 {strides = array<i32>} : memref<10x128xbf16, #tpu.memory_space<vmem>>, vector<10x128xbf16>,
    return
  }
  func.func @transform_0(%arg0: i32) -> (i32, i32) {
    %c0_i32 = arith.constant 0 : i32
    %c0_i32_0 = arith.constant 0 : i32
    return %arg0, %c0_i32 : i32, i32
  }
  func.func @transform_1(%arg0: i32) -> (i32, i32) {
    %c0_i32 = arith.constant 0 : i32
    %c0_i32_0 = arith.constant 0 : i32
    return %arg0, %c0_i32 : i32, i32
  }
  func.func @transform_2(%arg0: i32) -> (i32, i32) {
    %c0_i32 = arith.constant 0 : i32
    %c0_i32_0 = arith.constant 0 : i32
    return %arg0, %c0_i32 : i32, i32
  }
  func.func @transform_3(%arg0: i32) -> (i32, i32) {
    %c0_i32 = arith.constant 0 : i32
    %c0_i32_0 = arith.constant 0 : i32
    return %arg0, %c0_i32 : i32, i32
  }
  func.func @transform_4(%arg0: i32) -> (i32, i32) {
    %c0_i32 = arith.constant 0 : i32
    %c0_i32_0 = arith.constant 0 : i32
    %c0_i32_1 = arith.constant 0 : i32
    return %c0_i32, %c0_i32_0 : i32, i32
  }
  func.func @transform_5(%arg0: i32) -> (i32, i32) {
    %c0_i32 = arith.constant 0 : i32
    %c0_i32_0 = arith.constant 0 : i32
    %c0_i32_1 = arith.constant 0 : i32
    return %c0_i32, %c0_i32_0 : i32, i32
  }
  func.func @transform_6(%arg0: i32) -> (i32, i32) {
    %c0_i32 = arith.constant 0 : i32
    %c0_i32_0 = arith.constant 0 : i32
    %c0_i32_1 = arith.constant 0 : i32
    return %c0_i32, %c0_i32_0 : i32, i32
  }
  func.func @transform_7(%arg0: i32) -> (i32, i32) {
    %c0_i32 = arith.constant 0 : i32
    %c0_i32_0 = arith.constant 0 : i32
    %c0_i32_1 = arith.constant 0 : i32
    return %c0_i32, %c0_i32_0 : i32, i32
  }
  func.func @transform_8(%arg0: i32) -> (i32, i32) {
    %c0_i32 = arith.constant 0 : i32
    %c0_i32_0 = arith.constant 0 : i32
    return %arg0, %c0_i32 : i32, i32
  }
}

module attributes {stable_mosaic.version = 11 : i64} {
  func.func @_fused_mlp_kernel(%arg0: i32, %arg1: memref<12x6xf32, #tpu.memory_space<vmem>>, %arg2: memref<12x128xbf16, #tpu.memory_space<vmem>>, %arg3: memref<12x128xbf16, #tpu.memory_space<vmem>>, %arg4: memref<12x5xf32, #tpu.memory_space<vmem>>, %arg5: memref<267x128xbf16, #tpu.memory_space<vmem>>, %arg6: memref<1x128xf32, #tpu.memory_space<vmem>>, %arg7: memref<128x128xbf16, #tpu.memory_space<vmem>>, %arg8: memref<3x128xf32, #tpu.memory_space<vmem>>, %arg9: memref<12x128xbf16, #tpu.memory_space<vmem>>) attributes {dimension_semantics = [#tpu.dimension_semantics<parallel>], iteration_bounds = array<i64: 1>, scalar_prefetch = 0 : i64, scratch_operands = 0 : i64, tpu.core_type = #tpu.core_type<tc>, window_params = [{transform_indices = @transform_0, window_bounds = array<i64: 12, 6>}, {transform_indices = @transform_1, window_bounds = array<i64: 12, 128>}, {transform_indices = @transform_2, window_bounds = array<i64: 12, 128>}, {transform_indices = @transform_3, window_bounds = array<i64: 12, 5>}, {pipeline_mode = #tpu.pipeline_mode<synchronous>, transform_indices = @transform_4, window_bounds = array<i64: 267, 128>}, {pipeline_mode = #tpu.pipeline_mode<synchronous>, transform_indices = @transform_5, window_bounds = array<i64: 1, 128>}, {pipeline_mode = #tpu.pipeline_mode<synchronous>, transform_indices = @transform_6, window_bounds = array<i64: 128, 128>}, {pipeline_mode = #tpu.pipeline_mode<synchronous>, transform_indices = @transform_7, window_bounds = array<i64: 3, 128>}, {transform_indices = @transform_8, window_bounds = array<i64: 12, 128>}]} {
    %c0 = arith.constant 0 : index
    %c0_0 = arith.constant 0 : index
    %0 = vector.load %arg1[%c0, %c0_0] : memref<12x6xf32, #tpu.memory_space<vmem>>, vector<12x6xf32>
    %c0_1 = arith.constant 0 : index
    %c0_2 = arith.constant 0 : index
    %1 = vector.load %arg2[%c0_1, %c0_2] : memref<12x128xbf16, #tpu.memory_space<vmem>>, vector<12x128xbf16>
    %2 = arith.extf %1 : vector<12x128xbf16> to vector<12x128xf32>
    %c0_3 = arith.constant 0 : index
    %c0_4 = arith.constant 0 : index
    %3 = vector.load %arg3[%c0_3, %c0_4] : memref<12x128xbf16, #tpu.memory_space<vmem>>, vector<12x128xbf16>
    %4 = arith.extf %3 : vector<12x128xbf16> to vector<12x128xf32>
    %c0_5 = arith.constant 0 : index
    %c0_6 = arith.constant 0 : index
    %5 = vector.load %arg4[%c0_5, %c0_6] : memref<12x5xf32, #tpu.memory_space<vmem>>, vector<12x5xf32>
    %6 = tpu.concatenate %0, %2, %4, %5 in 1 : vector<12x6xf32>, vector<12x128xf32>, vector<12x128xf32>, vector<12x5xf32> -> vector<12x267xf32>
    %7 = arith.truncf %6 : vector<12x267xf32> to vector<12x267xbf16>
    %c0_7 = arith.constant 0 : index
    %c0_8 = arith.constant 0 : index
    %8 = vector.load %arg5[%c0_7, %c0_8] : memref<267x128xbf16, #tpu.memory_space<vmem>>, vector<267x128xbf16>
    %cst = arith.constant dense<0.000000e+00> : vector<12x128xf32>
    %9 = tpu.matmul %7, %8, %cst {dimension_numbers = #tpu.dot_dimension_numbers<[1], [0], [0], [1], [0, 0, 1, 1], [], []>} : vector<12x267xbf16>, vector<267x128xbf16>, vector<12x128xf32> -> vector<12x128xf32>
    %c0_9 = arith.constant 0 : index
    %c0_10 = arith.constant 0 : index
    %10 = vector.load %arg6[%c0_9, %c0_10] : memref<1x128xf32, #tpu.memory_space<vmem>>, vector<1x128xf32>
    %11 = vector.broadcast %10 : vector<1x128xf32> to vector<12x128xf32>
    %12 = arith.addf %9, %11 : vector<12x128xf32>
    %cst_11 = arith.constant 0.000000e+00 : f32
    %13 = vector.broadcast %cst_11 : f32 to vector<12x128xf32>
    %14 = arith.maximumf %12, %13 : vector<12x128xf32>
    %15 = arith.truncf %14 : vector<12x128xf32> to vector<12x128xbf16>
    %c0_12 = arith.constant 0 : index
    %c0_13 = arith.constant 0 : index
    %16 = vector.load %arg7[%c0_12, %c0_13] : memref<128x128xbf16, #tpu.memory_space<vmem>>, vector<128x128xbf16>
    %cst_14 = arith.constant dense<0.000000e+00> : vector<12x128xf32>
    %17 = tpu.matmul %15, %16, %cst_14 {dimension_numbers = #tpu.dot_dimension_numbers<[1], [0], [0], [1], [0, 0, 1, 1], [], []>} : vector<12x128xbf16>, vector<128x128xbf16>, vector<12x128xf32> -> vector<12x128xf32>
    %c0_15 = arith.constant 0 : index
    %c0_16 = arith.constant 0 : index
    %18 = vector.load %arg8[%c0_15, %c0_16] : memref<3x128xf32, #tpu.memory_space<vmem>>, vector<3x128xf32>
    %19 = vector.extract_strided_slice %18 {offsets = [0, 0], sizes = [1, 128], strides = [1, 1]} : vector<3x128xf32> to vector<1x128xf32>
    %20 = vector.broadcast %19 : vector<1x128xf32> to vector<12x128xf32>
    %21 = arith.addf %17, %20 : vector<12x128xf32>
    %cst_17 = arith.constant 0.000000e+00 : f32
    %22 = vector.broadcast %cst_17 : f32 to vector<12x128xf32>
    %23 = arith.maximumf %21, %22 : vector<12x128xf32>
    %24 = tpu.iota {dimensions = array<i32: 1>} : vector<12x128xi32>
    %c12_i32 = arith.constant 12 : i32
    %25 = vector.broadcast %c12_i32 : i32 to vector<12x128xi32>
    %26 = arith.cmpi slt, %24, %25 : vector<12x128xi32>
    %27 = arith.extui %26 : vector<12x128xi1> to vector<12x128xi32>
    %28 = arith.sitofp %27 : vector<12x128xi32> to vector<12x128xf32>
    %29 = arith.mulf %23, %28 : vector<12x128xf32>
    %cst_18 = arith.constant dense<0.000000e+00> : vector<12xf32>
    %30 = vector.multi_reduction <add>, %29, %cst_18 [1] : vector<12x128xf32> to vector<12xf32>
    %31 = vector.shape_cast %30 : vector<12xf32> to vector<12x1xf32>
    %cst_19 = arith.constant 0.0833333358 : f32
    %32 = vector.broadcast %cst_19 : f32 to vector<12x1xf32>
    %33 = arith.mulf %31, %32 : vector<12x1xf32>
    %34 = vector.broadcast %33 : vector<12x1xf32> to vector<12x128xf32>
    %35 = arith.subf %23, %34 : vector<12x128xf32>
    %36 = arith.mulf %35, %28 : vector<12x128xf32>
    %37 = arith.mulf %36, %36 : vector<12x128xf32>
    %cst_20 = arith.constant dense<0.000000e+00> : vector<12xf32>
    %38 = vector.multi_reduction <add>, %37, %cst_20 [1] : vector<12x128xf32> to vector<12xf32>
    %39 = vector.shape_cast %38 : vector<12xf32> to vector<12x1xf32>
    %cst_21 = arith.constant 0.0833333358 : f32
    %40 = vector.broadcast %cst_21 : f32 to vector<12x1xf32>
    %41 = arith.mulf %39, %40 : vector<12x1xf32>
    %cst_22 = arith.constant 9.99999974E-6 : f32
    %42 = vector.broadcast %cst_22 : f32 to vector<12x1xf32>
    %43 = arith.addf %41, %42 : vector<12x1xf32>
    %44 = math.rsqrt %43 : vector<12x1xf32>
    %45 = vector.broadcast %44 : vector<12x1xf32> to vector<12x128xf32>
    %46 = arith.mulf %36, %45 : vector<12x128xf32>
    %47 = vector.extract_strided_slice %18 {offsets = [1, 0], sizes = [1, 128], strides = [1, 1]} : vector<3x128xf32> to vector<1x128xf32>
    %48 = vector.broadcast %47 : vector<1x128xf32> to vector<12x128xf32>
    %49 = arith.mulf %46, %48 : vector<12x128xf32>
    %50 = vector.extract_strided_slice %18 {offsets = [2, 0], sizes = [1, 128], strides = [1, 1]} : vector<3x128xf32> to vector<1x128xf32>
    %51 = vector.broadcast %50 : vector<1x128xf32> to vector<12x128xf32>
    %52 = arith.addf %49, %51 : vector<12x128xf32>
    %53 = arith.truncf %52 : vector<12x128xf32> to vector<12x128xbf16>
    %c0_23 = arith.constant 0 : index
    %c0_24 = arith.constant 0 : index
    %54 = vector.load %arg9[%c0_23, %c0_24] : memref<12x128xbf16, #tpu.memory_space<vmem>>, vector<12x128xbf16>
    tpu.vector_store %arg9[%c0_23, %c0_24], %53 {strides = array<i32>} : memref<12x128xbf16, #tpu.memory_space<vmem>>, vector<12x128xbf16>,
    return
  }
  func.func @transform_0(%arg0: i32) -> (i32, i32) {
    %c0_i32 = arith.constant 0 : i32
    %c0_i32_0 = arith.constant 0 : i32
    return %arg0, %c0_i32 : i32, i32
  }
  func.func @transform_1(%arg0: i32) -> (i32, i32) {
    %c0_i32 = arith.constant 0 : i32
    %c0_i32_0 = arith.constant 0 : i32
    return %arg0, %c0_i32 : i32, i32
  }
  func.func @transform_2(%arg0: i32) -> (i32, i32) {
    %c0_i32 = arith.constant 0 : i32
    %c0_i32_0 = arith.constant 0 : i32
    return %arg0, %c0_i32 : i32, i32
  }
  func.func @transform_3(%arg0: i32) -> (i32, i32) {
    %c0_i32 = arith.constant 0 : i32
    %c0_i32_0 = arith.constant 0 : i32
    return %arg0, %c0_i32 : i32, i32
  }
  func.func @transform_4(%arg0: i32) -> (i32, i32) {
    %c0_i32 = arith.constant 0 : i32
    %c0_i32_0 = arith.constant 0 : i32
    %c0_i32_1 = arith.constant 0 : i32
    return %c0_i32, %c0_i32_0 : i32, i32
  }
  func.func @transform_5(%arg0: i32) -> (i32, i32) {
    %c0_i32 = arith.constant 0 : i32
    %c0_i32_0 = arith.constant 0 : i32
    %c0_i32_1 = arith.constant 0 : i32
    return %c0_i32, %c0_i32_0 : i32, i32
  }
  func.func @transform_6(%arg0: i32) -> (i32, i32) {
    %c0_i32 = arith.constant 0 : i32
    %c0_i32_0 = arith.constant 0 : i32
    %c0_i32_1 = arith.constant 0 : i32
    return %c0_i32, %c0_i32_0 : i32, i32
  }
  func.func @transform_7(%arg0: i32) -> (i32, i32) {
    %c0_i32 = arith.constant 0 : i32
    %c0_i32_0 = arith.constant 0 : i32
    %c0_i32_1 = arith.constant 0 : i32
    return %c0_i32, %c0_i32_0 : i32, i32
  }
  func.func @transform_8(%arg0: i32) -> (i32, i32) {
    %c0_i32 = arith.constant 0 : i32
    %c0_i32_0 = arith.constant 0 : i32
    return %arg0, %c0_i32 : i32, i32
  }
}

</mosaic_0001>

<llo_original>
// kernel: graph_network.6
$region0: #{graph_network.6}
  #allocation0 [shape = 'u32[]', space=smem, size = 0x4, offset = 0x4, fixed_abs, tag = 'smem constant byte address 0x4 - core index']
  #allocation1 [shape = 'u32[144,128]{1,0:T(1,128)}', space=vmem, size = 0x12000, scoped, tag = 'internal scratch']
  %s0 = inlined_call_operand.vmem [shape: f32[10,8], index: 0, kind: input, shape index: {}]
  %s1 = inlined_call_operand.vmem [shape: bf16[8,24], index: 1, kind: input, shape index: {}]
  %s2 = inlined_call_operand.vmem [shape: f32[1,24], index: 2, kind: input, shape index: {}]
  %s3 = inlined_call_operand.vmem [shape: bf16[10,12], index: 3, kind: output, shape index: {0}]
  %s4 = inlined_call_operand.vmem [shape: bf16[10,12], index: 4, kind: output, shape index: {1}]
  %5 = xla_tuple %s3, %s4
  %s6 = sld [smem:[#allocation0]]
  $region30: #{graph_network.6} parent=0
    _
  %s8 = ssub.s32 1, %s6
  %s9 = scalar_select 0, %s8, %s6
  // Predicated region
  $region2: #{graph_network.6} parent=0 // pred_check
    _
  $region3: #{graph_network.6} parent=0 // pred_check_branch
    %11 = sbr.rel (0) target = $region5
  $region4: #{graph_network.6} parent=0 // pred_region
    _
  $region5: #{graph_network.6} parent=0 // pred_fallthru
    _
  // Predicated region
  $region6: #{graph_network.6} parent=0 // pred_check
    _
  $region7: #{graph_network.6} parent=0 // pred_check_branch
    %13 = sbr.rel (0) target = $region9
  $region8: #{graph_network.6} parent=0 // pred_region
    _
  $region9: #{graph_network.6} parent=0 // pred_fallthru
    _
  // Predicated region
  $region10: #{graph_network.6} parent=0 // pred_check
    _
  $region11: #{graph_network.6} parent=0 // pred_check_branch
    %15 = sbr.rel (0) target = $region13
  $region12: #{graph_network.6} parent=0 // pred_region
    _
  $region13: #{graph_network.6} parent=0 // pred_fallthru
    _
  %v17 = vld [vmem:[%s0] sm:$0xff]
  %v18 = vld [vmem:[%s0 + $0x8] sm:$0x3]
  %v19 = vpack.c.bf16 %v18, %v17
  %v20 = vld [vmem:[%s1] sm:$0xf]
  %v21 = vld [vmem:[%s2] sm:$0x1]
  %v23 = vlaneseq
  %v24 = vshrl.u32 %v23, 7
  %v25 = vsub.s32 0, %v24
  %v26 = vrot.slane %v21, %v25
  %vm28 = vcmask 64512
  %v30 = vsel %vm28, %v19, 0
  %vm32 = vcmask 1043456
  %v34 = vsel %vm32, %v20, 0
  %36 = vmatprep.subr.bf16.mxu0 0
  %37 = vmatpush1.bf16.msra.mxu0 0
  %38 = vmatprep.subr.bf16.mxu0 0
  %39 = vmatpush1.bf16.msra.mxu0 0
  %40 = vmatprep.subr.bf16.mxu0 0
  %41 = vmatpush1.bf16.msra.mxu0 0
  %42 = vmatprep.subr.bf16.mxu0 0
  %43 = vmatpush1.bf16.msra.mxu0 0
  %44 = vmatprep.subr.bf16.mxu0 0
  %45 = vmatpush1.bf16.msra.mxu0 0
  %46 = vmatprep.subr.bf16.mxu0 0
  %47 = vmatpush1.bf16.msra.mxu0 0
  %48 = vmatprep.subr.bf16.mxu0 0
  %49 = vmatpush1.bf16.msra.mxu0 0
  %50 = vmatprep.subr.bf16.mxu0 0
  %51 = vmatpush1.bf16.msra.mxu0 %v34
  %52 = vmatprep.subr.bf16.mxu0 0
  %53 = vmatpush2.bf16.msra.mxu0 0
  %54 = vmatprep.subr.bf16.mxu0 0
  %55 = vmatpush2.bf16.msra.mxu0 0
  %56 = vmatprep.subr.bf16.mxu0 0
  %57 = vmatpush2.bf16.msra.mxu0 0
  %58 = vmatprep.subr.bf16.mxu0 0
  %59 = vmatpush2.bf16.msra.mxu0 0
  %60 = vmatprep.subr.bf16.mxu0 0
  %61 = vmatpush2.bf16.msra.mxu0 0
  %62 = vmatprep.subr.bf16.mxu0 0
  %63 = vmatpush2.bf16.msra.mxu0 0
  %64 = vmatprep.subr.bf16.mxu0 0
  %65 = vmatpush2.bf16.msra.mxu0 0
  %66 = vmatprep.subr.bf16.mxu0 0
  %67 = vmatpush2.bf16.msra.mxu0 0
  %68 = vmatprep.mubr.bf16.mxu0 0
  %69 = vmatmul.mubr.bf16.gmra.mxu0 %v30
  %v70 = vpop.f32.mrf.mxu0
  %v71 = vadd.f32 %v26, %v70
  %v72 = vpop.f32.mrf.mxu0
  %v73 = vpop.f32.mrf.mxu0
  %v74 = vadd.f32 %v26, %v73
  %v75 = vpop.f32.mrf.mxu0
  %76 = vdwg.mxu0
  %v77 = vpack.c.bf16 %v74, %v71
  %v79 = vunpack.c.l.b16 %v77
  %v80 = vunpack.c.h.b16 %v77
  %v81 = vpack.c.b16 %v79, %v79
  %v82 = vpack.c.b16 %v80, %v80
  %vm85 = vcmask 93184
  %86 = vst.msk [vmem:[%s3] sm:$0xf] %vm85, %v81
  %vm87 = vcmask 90112
  %88 = vst.msk [vmem:[%s3 + $0x4] sm:$0x1] %vm87, %v82
  %89 = vrot.lane.b32.xlu0 %v81, 116
  %v90 = vpop.permute.xlu0 %89
  %91 = vrot.lane.b32.xlu0 %v82, 116
  %v92 = vpop.permute.xlu0 %91
  %95 = vst.msk [vmem:[%s4] sm:$0xf] %vm85, %v90
  %96 = vst.msk [vmem:[%s4 + $0x4] sm:$0x1] %vm87, %v92
  // Predicated region
  $region14: #{graph_network.6} parent=0 // pred_check
    _
  $region15: #{graph_network.6} parent=0 // pred_check_branch
    %98 = sbr.rel (0) target = $region17
  $region16: #{graph_network.6} parent=0 // pred_region
    _
  $region17: #{graph_network.6} parent=0 // pred_fallthru
    _
  // Predicated region
  $region18: #{graph_network.6} parent=0 // pred_check
    _
  $region19: #{graph_network.6} parent=0 // pred_check_branch
    %100 = sbr.rel (0) target = $region21
  $region20: #{graph_network.6} parent=0 // pred_region
    _
  $region21: #{graph_network.6} parent=0 // pred_fallthru
    _
  // Predicated region
  $region22: #{graph_network.6} parent=0 // pred_check
    _
  $region23: #{graph_network.6} parent=0 // pred_check_branch
    %102 = sbr.rel (0) target = $region25
  $region24: #{graph_network.6} parent=0 // pred_region
    _
  $region25: #{graph_network.6} parent=0 // pred_fallthru
    _
  // Predicated region
  $region26: #{graph_network.6} parent=0 // pred_check
    _
  $region27: #{graph_network.6} parent=0 // pred_check_branch
    %104 = sbr.rel (0) target = $region29
  $region28: #{graph_network.6} parent=0 // pred_region
    _
  $region29: #{graph_network.6} parent=0 // pred_fallthru
    _

// kernel: graph_network.7
$region0: #{graph_network.7}
  #allocation0 [shape = 'u32[]', space=smem, size = 0x4, offset = 0x4, fixed_abs, tag = 'smem constant byte address 0x4 - core index']
  #allocation1 [shape = 'u32[144,128]{1,0:T(1,128)}', space=vmem, size = 0x12000, scoped, tag = 'internal scratch']
  %s0 = inlined_call_operand.vmem [shape: f32[10,12], index: 0, kind: input, shape index: {}]
  %s1 = inlined_call_operand.vmem [shape: bf16[12,24], index: 1, kind: input, shape index: {}]
  %s2 = inlined_call_operand.vmem [shape: f32[1,24], index: 2, kind: input, shape index: {}]
  %s3 = inlined_call_operand.vmem [shape: bf16[10,12], index: 3, kind: output, shape index: {0}]
  %s4 = inlined_call_operand.vmem [shape: bf16[10,12], index: 4, kind: output, shape index: {1}]
  %5 = xla_tuple %s3, %s4
  %s6 = sld [smem:[#allocation0]]
  $region30: #{graph_network.7} parent=0
    _
  %s8 = ssub.s32 1, %s6
  %s9 = scalar_select 0, %s8, %s6
  // Predicated region
  $region2: #{graph_network.7} parent=0 // pred_check
    _
  $region3: #{graph_network.7} parent=0 // pred_check_branch
    %11 = sbr.rel (0) target = $region5
  $region4: #{graph_network.7} parent=0 // pred_region
    _
  $region5: #{graph_network.7} parent=0 // pred_fallthru
    _
  // Predicated region
  $region6: #{graph_network.7} parent=0 // pred_check
    _
  $region7: #{graph_network.7} parent=0 // pred_check_branch
    %13 = sbr.rel (0) target = $region9
  $region8: #{graph_network.7} parent=0 // pred_region
    _
  $region9: #{graph_network.7} parent=0 // pred_fallthru
    _
  // Predicated region
  $region10: #{graph_network.7} parent=0 // pred_check
    _
  $region11: #{graph_network.7} parent=0 // pred_check_branch
    %15 = sbr.rel (0) target = $region13
  $region12: #{graph_network.7} parent=0 // pred_region
    _
  $region13: #{graph_network.7} parent=0 // pred_fallthru
    _
  %v17 = vld [vmem:[%s0] sm:$0xff]
  %v18 = vld [vmem:[%s0 + $0x8] sm:$0x3]
  %v19 = vpack.c.bf16 %v18, %v17
  %v20 = vld [vmem:[%s1] sm:$0xf]
  %v21 = vld [vmem:[%s1 + $0x4] sm:$0x3]
  %v22 = vld [vmem:[%s2] sm:$0x1]
  %v24 = vlaneseq
  %v25 = vshrl.u32 %v24, 7
  %v26 = vsub.s32 0, %v25
  %v27 = vrot.slane %v22, %v26
  %v31 = vunpack.c.l.b16 %v20
  %v32 = vunpack.c.l.b16 %v21
  %v33 = vpack.c.b16 %v32, %v31
  %vm34 = vcmask 97280
  %v36 = vsel %vm34, %v19, 0
  %vm38 = vcmask 1045504
  %v40 = vsel %vm38, %v33, 0
  %42 = vmatprep.subr.bf16.mxu0 0
  %43 = vmatpush1.bf16.msra.mxu0 0
  %44 = vmatprep.subr.bf16.mxu0 0
  %45 = vmatpush1.bf16.msra.mxu0 0
  %46 = vmatprep.subr.bf16.mxu0 0
  %47 = vmatpush1.bf16.msra.mxu0 0
  %48 = vmatprep.subr.bf16.mxu0 0
  %49 = vmatpush1.bf16.msra.mxu0 0
  %50 = vmatprep.subr.bf16.mxu0 0
  %51 = vmatpush1.bf16.msra.mxu0 0
  %52 = vmatprep.subr.bf16.mxu0 0
  %53 = vmatpush1.bf16.msra.mxu0 0
  %54 = vmatprep.subr.bf16.mxu0 0
  %55 = vmatpush1.bf16.msra.mxu0 0
  %56 = vmatprep.subr.bf16.mxu0 0
  %57 = vmatpush1.bf16.msra.mxu0 %v40
  %58 = vmatprep.subr.bf16.mxu0 0
  %59 = vmatpush2.bf16.msra.mxu0 0
  %60 = vmatprep.subr.bf16.mxu0 0
  %61 = vmatpush2.bf16.msra.mxu0 0
  %62 = vmatprep.subr.bf16.mxu0 0
  %63 = vmatpush2.bf16.msra.mxu0 0
  %64 = vmatprep.subr.bf16.mxu0 0
  %65 = vmatpush2.bf16.msra.mxu0 0
  %66 = vmatprep.subr.bf16.mxu0 0
  %67 = vmatpush2.bf16.msra.mxu0 0
  %68 = vmatprep.subr.bf16.mxu0 0
  %69 = vmatpush2.bf16.msra.mxu0 0
  %70 = vmatprep.subr.bf16.mxu0 0
  %71 = vmatpush2.bf16.msra.mxu0 0
  %72 = vmatprep.subr.bf16.mxu0 0
  %73 = vmatpush2.bf16.msra.mxu0 0
  %74 = vmatprep.mubr.bf16.mxu0 0
  %75 = vmatmul.mubr.bf16.gmra.mxu0 %v36
  %v76 = vpop.f32.mrf.mxu0
  %v77 = vadd.f32 %v27, %v76
  %v78 = vpop.f32.mrf.mxu0
  %v79 = vpop.f32.mrf.mxu0
  %v80 = vadd.f32 %v27, %v79
  %v81 = vpop.f32.mrf.mxu0
  %82 = vdwg.mxu0
  %v83 = vpack.c.bf16 %v80, %v77
  %v85 = vunpack.c.l.b16 %v83
  %v86 = vunpack.c.h.b16 %v83
  %v87 = vpack.c.b16 %v85, %v85
  %v88 = vpack.c.b16 %v86, %v86
  %vm91 = vcmask 93184
  %92 = vst.msk [vmem:[%s3] sm:$0xf] %vm91, %v87
  %vm93 = vcmask 90112
  %94 = vst.msk [vmem:[%s3 + $0x4] sm:$0x1] %vm93, %v88
  %95 = vrot.lane.b32.xlu0 %v87, 116
  %v96 = vpop.permute.xlu0 %95
  %97 = vrot.lane.b32.xlu0 %v88, 116
  %v98 = vpop.permute.xlu0 %97
  %101 = vst.msk [vmem:[%s4] sm:$0xf] %vm91, %v96
  %102 = vst.msk [vmem:[%s4 + $0x4] sm:$0x1] %vm93, %v98
  // Predicated region
  $region14: #{graph_network.7} parent=0 // pred_check
    _
  $region15: #{graph_network.7} parent=0 // pred_check_branch
    %104 = sbr.rel (0) target = $region17
  $region16: #{graph_network.7} parent=0 // pred_region
    _
  $region17: #{graph_network.7} parent=0 // pred_fallthru
    _
  // Predicated region
  $region18: #{graph_network.7} parent=0 // pred_check
    _
  $region19: #{graph_network.7} parent=0 // pred_check_branch
    %106 = sbr.rel (0) target = $region21
  $region20: #{graph_network.7} parent=0 // pred_region
    _
  $region21: #{graph_network.7} parent=0 // pred_fallthru
    _
  // Predicated region
  $region22: #{graph_network.7} parent=0 // pred_check
    _
  $region23: #{graph_network.7} parent=0 // pred_check_branch
    %108 = sbr.rel (0) target = $region25
  $region24: #{graph_network.7} parent=0 // pred_region
    _
  $region25: #{graph_network.7} parent=0 // pred_fallthru
    _
  // Predicated region
  $region26: #{graph_network.7} parent=0 // pred_check
    _
  $region27: #{graph_network.7} parent=0 // pred_check_branch
    %110 = sbr.rel (0) target = $region29
  $region28: #{graph_network.7} parent=0 // pred_region
    _
  $region29: #{graph_network.7} parent=0 // pred_fallthru
    _

// kernel: graph_network.9
$region0: #{graph_network.9}
  #allocation0 [shape = 'u32[]', space=smem, size = 0x4, offset = 0x4, fixed_abs, tag = 'smem constant byte address 0x4 - core index']
  #allocation1 [shape = 'u32[144,128]{1,0:T(1,128)}', space=vmem, size = 0x12000, scoped, tag = 'internal scratch']
  %s0 = inlined_call_operand.vmem [shape: f32[10,12], index: 0, kind: input, shape index: {}]
  %s1 = inlined_call_operand.vmem [shape: bf16[12,10], index: 1, kind: input, shape index: {}]
  %s2 = inlined_call_operand.vmem [shape: f32[1,10], index: 2, kind: input, shape index: {}]
  %s3 = inlined_call_operand.vmem [shape: bf16[10,5], index: 3, kind: output, shape index: {0}]
  %s4 = inlined_call_operand.vmem [shape: bf16[10,5], index: 4, kind: output, shape index: {1}]
  %5 = xla_tuple %s3, %s4
  %s6 = sld [smem:[#allocation0]]
  $region30: #{graph_network.9} parent=0
    _
  %s8 = ssub.s32 1, %s6
  %s9 = scalar_select 0, %s8, %s6
  // Predicated region
  $region2: #{graph_network.9} parent=0 // pred_check
    _
  $region3: #{graph_network.9} parent=0 // pred_check_branch
    %11 = sbr.rel (0) target = $region5
  $region4: #{graph_network.9} parent=0 // pred_region
    _
  $region5: #{graph_network.9} parent=0 // pred_fallthru
    _
  // Predicated region
  $region6: #{graph_network.9} parent=0 // pred_check
    _
  $region7: #{graph_network.9} parent=0 // pred_check_branch
    %13 = sbr.rel (0) target = $region9
  $region8: #{graph_network.9} parent=0 // pred_region
    _
  $region9: #{graph_network.9} parent=0 // pred_fallthru
    _
  // Predicated region
  $region10: #{graph_network.9} parent=0 // pred_check
    _
  $region11: #{graph_network.9} parent=0 // pred_check_branch
    %15 = sbr.rel (0) target = $region13
  $region12: #{graph_network.9} parent=0 // pred_region
    _
  $region13: #{graph_network.9} parent=0 // pred_fallthru
    _
  %v17 = vld [vmem:[%s0] sm:$0xff]
  %v18 = vld [vmem:[%s0 + $0x8] sm:$0x3]
  %v19 = vpack.c.bf16 %v18, %v17
  %v20 = vld [vmem:[%s1] sm:$0xf]
  %v21 = vld [vmem:[%s1 + $0x4] sm:$0x3]
  %v22 = vld [vmem:[%s2] sm:$0x1]
  %v24 = vlaneseq
  %v25 = vshrl.u32 %v24, 7
  %v26 = vsub.s32 0, %v25
  %v27 = vrot.slane %v22, %v26
  %v31 = vunpack.c.l.b16 %v20
  %v32 = vunpack.c.l.b16 %v21
  %v33 = vpack.c.b16 %v32, %v31
  %vm34 = vcmask 97280
  %v36 = vsel %vm34, %v19, 0
  %vm38 = vcmask 1045504
  %v40 = vsel %vm38, %v33, 0
  %42 = vmatprep.subr.bf16.mxu0 0
  %43 = vmatpush1.bf16.msra.mxu0 0
  %44 = vmatprep.subr.bf16.mxu0 0
  %45 = vmatpush1.bf16.msra.mxu0 0
  %46 = vmatprep.subr.bf16.mxu0 0
  %47 = vmatpush1.bf16.msra.mxu0 0
  %48 = vmatprep.subr.bf16.mxu0 0
  %49 = vmatpush1.bf16.msra.mxu0 0
  %50 = vmatprep.subr.bf16.mxu0 0
  %51 = vmatpush1.bf16.msra.mxu0 0
  %52 = vmatprep.subr.bf16.mxu0 0
  %53 = vmatpush1.bf16.msra.mxu0 0
  %54 = vmatprep.subr.bf16.mxu0 0
  %55 = vmatpush1.bf16.msra.mxu0 0
  %56 = vmatprep.subr.bf16.mxu0 0
  %57 = vmatpush1.bf16.msra.mxu0 %v40
  %58 = vmatprep.subr.bf16.mxu0 0
  %59 = vmatpush2.bf16.msra.mxu0 0
  %60 = vmatprep.subr.bf16.mxu0 0
  %61 = vmatpush2.bf16.msra.mxu0 0
  %62 = vmatprep.subr.bf16.mxu0 0
  %63 = vmatpush2.bf16.msra.mxu0 0
  %64 = vmatprep.subr.bf16.mxu0 0
  %65 = vmatpush2.bf16.msra.mxu0 0
  %66 = vmatprep.subr.bf16.mxu0 0
  %67 = vmatpush2.bf16.msra.mxu0 0
  %68 = vmatprep.subr.bf16.mxu0 0
  %69 = vmatpush2.bf16.msra.mxu0 0
  %70 = vmatprep.subr.bf16.mxu0 0
  %71 = vmatpush2.bf16.msra.mxu0 0
  %72 = vmatprep.subr.bf16.mxu0 0
  %73 = vmatpush2.bf16.msra.mxu0 0
  %74 = vmatprep.mubr.bf16.mxu0 0
  %75 = vmatmul.mubr.bf16.gmra.mxu0 %v36
  %v76 = vpop.f32.mrf.mxu0
  %v77 = vadd.f32 %v27, %v76
  %v78 = vpop.f32.mrf.mxu0
  %v79 = vpop.f32.mrf.mxu0
  %v80 = vadd.f32 %v27, %v79
  %v81 = vpop.f32.mrf.mxu0
  %82 = vdwg.mxu0
  %v83 = vpack.c.bf16 %v80, %v77
  %v85 = vunpack.c.l.b16 %v83
  %v86 = vunpack.c.h.b16 %v83
  %v87 = vpack.c.b16 %v85, %v85
  %v88 = vpack.c.b16 %v86, %v86
  %vm91 = vcmask 35840
  %92 = vst.msk [vmem:[%s3] sm:$0xf] %vm91, %v87
  %vm93 = vcmask 32768
  %94 = vst.msk [vmem:[%s3 + $0x4] sm:$0x1] %vm93, %v88
  %95 = vrot.lane.b32.xlu0 %v87, 123
  %v96 = vpop.permute.xlu0 %95
  %97 = vrot.lane.b32.xlu0 %v88, 123
  %v98 = vpop.permute.xlu0 %97
  %101 = vst.msk [vmem:[%s4] sm:$0xf] %vm91, %v96
  %102 = vst.msk [vmem:[%s4 + $0x4] sm:$0x1] %vm93, %v98
  // Predicated region
  $region14: #{graph_network.9} parent=0 // pred_check
    _
  $region15: #{graph_network.9} parent=0 // pred_check_branch
    %104 = sbr.rel (0) target = $region17
  $region16: #{graph_network.9} parent=0 // pred_region
    _
  $region17: #{graph_network.9} parent=0 // pred_fallthru
    _
  // Predicated region
  $region18: #{graph_network.9} parent=0 // pred_check
    _
  $region19: #{graph_network.9} parent=0 // pred_check_branch
    %106 = sbr.rel (0) target = $region21
  $region20: #{graph_network.9} parent=0 // pred_region
    _
  $region21: #{graph_network.9} parent=0 // pred_fallthru
    _
  // Predicated region
  $region22: #{graph_network.9} parent=0 // pred_check
    _
  $region23: #{graph_network.9} parent=0 // pred_check_branch
    %108 = sbr.rel (0) target = $region25
  $region24: #{graph_network.9} parent=0 // pred_region
    _
  $region25: #{graph_network.9} parent=0 // pred_fallthru
    _
  // Predicated region
  $region26: #{graph_network.9} parent=0 // pred_check
    _
  $region27: #{graph_network.9} parent=0 // pred_check_branch
    %110 = sbr.rel (0) target = $region29
  $region28: #{graph_network.9} parent=0 // pred_region
    _
  $region29: #{graph_network.9} parent=0 // pred_fallthru
    _

// kernel: graph_network.10
$region0: #{graph_network.10}
  #allocation0 [shape = 'u32[]', space=smem, size = 0x4, offset = 0x4, fixed_abs, tag = 'smem constant byte address 0x4 - core index']
  #allocation1 [shape = 'u32[144,128]{1,0:T(1,128)}', space=vmem, size = 0x12000, scoped, tag = 'internal scratch']
  %s0 = inlined_call_operand.vmem [shape: f32[10,8], index: 0, kind: input, shape index: {}]
  %s1 = inlined_call_operand.vmem [shape: f32[10,6], index: 1, kind: input, shape index: {}]
  %s2 = inlined_call_operand.vmem [shape: f32[10,6], index: 2, kind: input, shape index: {}]
  %s3 = inlined_call_operand.vmem [shape: f32[10,5], index: 3, kind: input, shape index: {}]
  %s4 = inlined_call_operand.vmem [shape: bf16[25,128], index: 4, kind: input, shape index: {}]
  %s5 = inlined_call_operand.vmem [shape: f32[1,128], index: 5, kind: input, shape index: {}]
  %s6 = inlined_call_operand.vmem [shape: bf16[128,128], index: 6, kind: input, shape index: {}]
  %s7 = inlined_call_operand.vmem [shape: f32[3,128], index: 7, kind: input, shape index: {}]
  %s8 = inlined_call_operand.vmem [shape: bf16[10,128], index: 8, kind: output, shape index: {}]
  %s9 = sld [smem:[#allocation0]]
  $region42: #{graph_network.10} parent=0
    _
  %s11 = ssub.s32 1, %s9
  %s12 = scalar_select 0, %s11, %s9
  // Predicated region
  $region2: #{graph_network.10} parent=0 // pred_check
    _
  $region3: #{graph_network.10} parent=0 // pred_check_branch
    %14 = sbr.rel (0) target = $region5
  $region4: #{graph_network.10} parent=0 // pred_region
    _
  $region5: #{graph_network.10} parent=0 // pred_fallthru
    _
  // Predicated region
  $region6: #{graph_network.10} parent=0 // pred_check
    _
  $region7: #{graph_network.10} parent=0 // pred_check_branch
    %16 = sbr.rel (0) target = $region9
  $region8: #{graph_network.10} parent=0 // pred_region
    _
  $region9: #{graph_network.10} parent=0 // pred_fallthru
    _
  // Predicated region
  $region10: #{graph_network.10} parent=0 // pred_check
    _
  $region11: #{graph_network.10} parent=0 // pred_check_branch
    %18 = sbr.rel (0) target = $region13
  $region12: #{graph_network.10} parent=0 // pred_region
    _
  $region13: #{graph_network.10} parent=0 // pred_fallthru
    _
  // Predicated region
  $region14: #{graph_network.10} parent=0 // pred_check
    _
  $region15: #{graph_network.10} parent=0 // pred_check_branch
    %20 = sbr.rel (0) target = $region17
  $region16: #{graph_network.10} parent=0 // pred_region
    _
  $region17: #{graph_network.10} parent=0 // pred_fallthru
    _
  // Predicated region
  $region18: #{graph_network.10} parent=0 // pred_check
    _
  $region19: #{graph_network.10} parent=0 // pred_check_branch
    %22 = sbr.rel (0) target = $region21
  $region20: #{graph_network.10} parent=0 // pred_region
    _
  $region21: #{graph_network.10} parent=0 // pred_fallthru
    _
  // Predicated region
  $region22: #{graph_network.10} parent=0 // pred_check
    _
  $region23: #{graph_network.10} parent=0 // pred_check_branch
    %24 = sbr.rel (0) target = $region25
  $region24: #{graph_network.10} parent=0 // pred_region
    _
  $region25: #{graph_network.10} parent=0 // pred_fallthru
    _
  // Predicated region
  $region26: #{graph_network.10} parent=0 // pred_check
    _
  $region27: #{graph_network.10} parent=0 // pred_check_branch
    %26 = sbr.rel (0) target = $region29
  $region28: #{graph_network.10} parent=0 // pred_region
    _
  $region29: #{graph_network.10} parent=0 // pred_fallthru
    _
  // Predicated region
  $region30: #{graph_network.10} parent=0 // pred_check
    _
  $region31: #{graph_network.10} parent=0 // pred_check_branch
    %28 = sbr.rel (0) target = $region33
  $region32: #{graph_network.10} parent=0 // pred_region
    _
  $region33: #{graph_network.10} parent=0 // pred_fallthru
    _
  %v30 = vld [vmem:[%s0] sm:$0xff]
  %v31 = vld [vmem:[%s0 + $0x8] sm:$0x3]
  %v32 = vld [vmem:[%s1] sm:$0xff]
  %v33 = vld [vmem:[%s1 + $0x8] sm:$0x3]
  %v34 = vld [vmem:[%s2] sm:$0xff]
  %v35 = vld [vmem:[%s2 + $0x8] sm:$0x3]
  %v36 = vld [vmem:[%s3] sm:$0xff]
  %v37 = vld [vmem:[%s3 + $0x8] sm:$0x3]
  %40 = vrot.lane.b32.xlu0 %v32, 8
  %v41 = vpop.permute.xlu0 %40
  %42 = vrot.lane.b32.xlu0 %v33, 8
  %v43 = vpop.permute.xlu0 %42
  %48 = vrot.lane.b32.xlu0 %v34, 14
  %v49 = vpop.permute.xlu0 %48
  %50 = vrot.lane.b32.xlu0 %v35, 14
  %v51 = vpop.permute.xlu0 %50
  %56 = vrot.lane.b32.xlu0 %v36, 20
  %v57 = vpop.permute.xlu0 %56
  %58 = vrot.lane.b32.xlu0 %v37, 20
  %v59 = vpop.permute.xlu0 %58
  %vm62 = vcmask 64512
  %v63 = vsel %vm62, %v30, %v41
  %v64 = vsel %vm62, %v31, %v43
  %vm65 = vcmask 113664
  %v66 = vsel %vm65, %v63, %v49
  %v67 = vsel %vm65, %v64, %v51
  %vm68 = vcmask 162816
  %v69 = vsel %vm68, %v66, %v57
  %v70 = vsel %vm68, %v67, %v59
  %v71 = vpack.c.bf16 %v70, %v69
  %v72 = vld [vmem:[%s4] sm:$0xf]
  %v73 = vld [vmem:[%s4 + $0x4] sm:$0xf]
  %v74 = vld [vmem:[%s4 + $0x8] sm:$0xf]
  %v75 = vld [vmem:[%s4 + $0xc] sm:$0x1]
  %v76 = vld [vmem:[%s5] sm:$0x1]
  %v78 = vlaneseq
  %v79 = vshrl.u32 %v78, 7
  %v80 = vsub.s32 0, %v79
  %v81 = vrot.slane %v76, %v80
  %v87 = vunpack.c.l.b16 %v72
  %v88 = vunpack.c.l.b16 %v73
  %v89 = vunpack.c.l.b16 %v74
  %v90 = vunpack.c.l.b16 %v75
  %v91 = vpack.c.b16 %v88, %v87
  %v92 = vpack.c.b16 %v90, %v89
  %vm94 = vcmask 203776
  %v96 = vsel %vm94, %v71, 0
  %vm98 = vcmask 1043456
  %vm99 = vcmask 1044480
  %v100 = vsel %vm98, 4294967295, 65535
  %v101 = vsel %vm99, %v100, 0
  %v103 = vand.u32 %v92, %v101
  %105 = vmatprep.subr.bf16.mxu0 0
  %106 = vmatpush1.bf16.msra.mxu0 0
  %107 = vmatprep.subr.bf16.mxu0 0
  %108 = vmatpush1.bf16.msra.mxu0 0
  %109 = vmatprep.subr.bf16.mxu0 0
  %110 = vmatpush1.bf16.msra.mxu0 0
  %111 = vmatprep.subr.bf16.mxu0 0
  %112 = vmatpush1.bf16.msra.mxu0 0
  %113 = vmatprep.subr.bf16.mxu0 0
  %114 = vmatpush1.bf16.msra.mxu0 0
  %115 = vmatprep.subr.bf16.mxu0 0
  %116 = vmatpush1.bf16.msra.mxu0 0
  %117 = vmatprep.subr.bf16.mxu0 0
  %118 = vmatpush1.bf16.msra.mxu0 %v103
  %119 = vmatprep.subr.bf16.mxu0 0
  %120 = vmatpush1.bf16.msra.mxu0 %v91
  %121 = vmatprep.subr.bf16.mxu0 0
  %122 = vmatpush2.bf16.msra.mxu0 0
  %123 = vmatprep.subr.bf16.mxu0 0
  %124 = vmatpush2.bf16.msra.mxu0 0
  %125 = vmatprep.subr.bf16.mxu0 0
  %126 = vmatpush2.bf16.msra.mxu0 0
  %127 = vmatprep.subr.bf16.mxu0 0
  %128 = vmatpush2.bf16.msra.mxu0 0
  %129 = vmatprep.subr.bf16.mxu0 0
  %130 = vmatpush2.bf16.msra.mxu0 0
  %131 = vmatprep.subr.bf16.mxu0 0
  %132 = vmatpush2.bf16.msra.mxu0 0
  %133 = vmatprep.subr.bf16.mxu0 0
  %134 = vmatpush2.bf16.msra.mxu0 0
  %135 = vmatprep.subr.bf16.mxu0 0
  %136 = vmatpush2.bf16.msra.mxu0 0
  %137 = vmatprep.mubr.bf16.mxu0 0
  %138 = vmatmul.mubr.bf16.gmra.mxu0 %v96
  %v139 = vpop.f32.mrf.mxu0
  %v140 = vadd.f32 %v81, %v139
  %v141 = vpop.f32.mrf.mxu0
  %v142 = vpop.f32.mrf.mxu0
  %v143 = vadd.f32 %v81, %v142
  %v144 = vpop.f32.mrf.mxu0
  %145 = vdwg.mxu0
  %v146 = vmax.f32 %v140, 0.0
  %v147 = vmax.f32 %v143, 0.0
  %v148 = vpack.c.bf16 %v147, %v146
  %v149 = vld [vmem:[%s6] sm:$0xf]
  %v150 = vld [vmem:[%s6 + $0x4] sm:$0xf]
  %v151 = vld [vmem:[%s6 + $0x8] sm:$0xf]
  %v152 = vld [vmem:[%s6 + $0xc] sm:$0xf]
  %v153 = vld [vmem:[%s6 + $0x10] sm:$0xf]
  %v154 = vld [vmem:[%s6 + $0x14] sm:$0xf]
  %v155 = vld [vmem:[%s6 + $0x18] sm:$0xf]
  %v156 = vld [vmem:[%s6 + $0x1c] sm:$0xf]
  %v157 = vld [vmem:[%s6 + $0x20] sm:$0xf]
  %v158 = vld [vmem:[%s6 + $0x24] sm:$0xf]
  %v159 = vld [vmem:[%s6 + $0x28] sm:$0xf]
  %v160 = vld [vmem:[%s6 + $0x2c] sm:$0xf]
  %v161 = vld [vmem:[%s6 + $0x30] sm:$0xf]
  %v162 = vld [vmem:[%s6 + $0x34] sm:$0xf]
  %v163 = vld [vmem:[%s6 + $0x38] sm:$0xf]
  %v164 = vld [vmem:[%s6 + $0x3c] sm:$0xf]
  %v165 = vld [vmem:[%s7] sm:$0x7]
  %v166 = vlaneseq
  %v167 = vshrl.u32 %v166, 7
  %v168 = vsub.s32 0, %v167
  %v169 = vrot.slane %v165, %v168
  %v186 = vunpack.c.l.b16 %v149
  %v187 = vunpack.c.l.b16 %v150
  %v188 = vunpack.c.l.b16 %v151
  %v189 = vunpack.c.l.b16 %v152
  %v190 = vunpack.c.l.b16 %v153
  %v191 = vunpack.c.l.b16 %v154
  %v192 = vunpack.c.l.b16 %v155
  %v193 = vunpack.c.l.b16 %v156
  %v194 = vunpack.c.l.b16 %v157
  %v195 = vunpack.c.l.b16 %v158
  %v196 = vunpack.c.l.b16 %v159
  %v197 = vunpack.c.l.b16 %v160
  %v198 = vunpack.c.l.b16 %v161
  %v199 = vunpack.c.l.b16 %v162
  %v200 = vunpack.c.l.b16 %v163
  %v201 = vunpack.c.l.b16 %v164
  %v202 = vpack.c.b16 %v187, %v186
  %v203 = vpack.c.b16 %v189, %v188
  %v204 = vpack.c.b16 %v191, %v190
  %v205 = vpack.c.b16 %v193, %v192
  %v206 = vpack.c.b16 %v195, %v194
  %v207 = vpack.c.b16 %v197, %v196
  %v208 = vpack.c.b16 %v199, %v198
  %v209 = vpack.c.b16 %v201, %v200
  %218 = vmatprep.subr.bf16.mxu0 0
  %219 = vmatpush1.bf16.msra.mxu0 %v209
  %220 = vmatprep.subr.bf16.mxu0 0
  %221 = vmatpush1.bf16.msra.mxu0 %v208
  %222 = vmatprep.subr.bf16.mxu0 0
  %223 = vmatpush1.bf16.msra.mxu0 %v207
  %224 = vmatprep.subr.bf16.mxu0 0
  %225 = vmatpush1.bf16.msra.mxu0 %v206
  %226 = vmatprep.subr.bf16.mxu0 0
  %227 = vmatpush1.bf16.msra.mxu0 %v205
  %228 = vmatprep.subr.bf16.mxu0 0
  %229 = vmatpush1.bf16.msra.mxu0 %v204
  %230 = vmatprep.subr.bf16.mxu0 0
  %231 = vmatpush1.bf16.msra.mxu0 %v203
  %232 = vmatprep.subr.bf16.mxu0 0
  %233 = vmatpush1.bf16.msra.mxu0 %v202
  %234 = vmatprep.subr.bf16.mxu0 0
  %235 = vmatpush2.bf16.msra.mxu0 0
  %236 = vmatprep.subr.bf16.mxu0 0
  %237 = vmatpush2.bf16.msra.mxu0 0
  %238 = vmatprep.subr.bf16.mxu0 0
  %239 = vmatpush2.bf16.msra.mxu0 0
  %240 = vmatprep.subr.bf16.mxu0 0
  %241 = vmatpush2.bf16.msra.mxu0 0
  %242 = vmatprep.subr.bf16.mxu0 0
  %243 = vmatpush2.bf16.msra.mxu0 0
  %244 = vmatprep.subr.bf16.mxu0 0
  %245 = vmatpush2.bf16.msra.mxu0 0
  %246 = vmatprep.subr.bf16.mxu0 0
  %247 = vmatpush2.bf16.msra.mxu0 0
  %248 = vmatprep.subr.bf16.mxu0 0
  %249 = vmatpush2.bf16.msra.mxu0 0
  %250 = vmatprep.mubr.bf16.mxu0 0
  %251 = vmatmul.mubr.bf16.gmra.mxu0 %v148
  %v252 = vpop.f32.mrf.mxu0
  %v253 = vadd.f32 %v169, %v252
  %v254 = vpop.f32.mrf.mxu0
  %v255 = vpop.f32.mrf.mxu0
  %v256 = vadd.f32 %v169, %v255
  %v257 = vpop.f32.mrf.mxu0
  %258 = vdwg.mxu0
  %v259 = vmax.f32 %v253, 0.0
  %v260 = vmax.f32 %v256, 0.0
  %v261 = vlaneseq
  %v262 = vand.u32 %v261, 127
  %vm263 = vcmp.lt.s32.totalorder %v262, 16
  %v264 = vsel %vm263, 1, 0
  %v265 = vcvt.s32.f32 %v264
  %v266 = vmul.f32 %v259, %v265
  %v267 = vmul.f32 %v260, %v265
  %268 = vadd.xlane.f32.xlu0 %v266
  %v269 = vpop.xlane.xlu0 %268
  %vm270 = vcmask 1041408
  %v271 = vsel %vm270, %v267, 0.0
  %272 = vadd.xlane.f32.xlu0 %v271
  %v273 = vpop.xlane.xlu0 %272
  %v274 = vmul.f32 %v269, 0.0625
  %v275 = vmul.f32 %v273, 0.0625
  %v276 = vsub.f32 %v259, %v274
  %v277 = vsub.f32 %v260, %v275
  %v278 = vmul.f32 %v276, %v265
  %v279 = vmul.f32 %v277, %v265
  %v280 = vmul.f32 %v278, %v278
  %v281 = vmul.f32 %v279, %v279
  %282 = vadd.xlane.f32.xlu0 %v280
  %v283 = vpop.xlane.xlu0 %282
  %v284 = vsel %vm270, %v281, 0.0
  %285 = vadd.xlane.f32.xlu0 %v284
  %v286 = vpop.xlane.xlu0 %285
  %v287 = vmul.f32 %v283, 0.0625
  %v288 = vmul.f32 %v286, 0.0625
  %v289 = vadd.f32 %v287, 1e-05
  %v290 = vadd.f32 %v288, 1e-05
  %v291 = vrsqrt.pop %v289
  %v292 = vrsqrt.pop %v290
  %v293 = vmul.f32 %v278, %v291
  %v294 = vmul.f32 %v279, %v292
  %v295 = vlaneseq
  %v296 = vshrl.u32 %v295, 7
  %v297 = vsub.s32 1, %v296
  %v298 = vrot.slane %v165, %v297
  %v299 = vmul.f32 %v293, %v298
  %v300 = vmul.f32 %v294, %v298
  %v301 = vlaneseq
  %v302 = vshrl.u32 %v301, 7
  %v303 = vsub.s32 2, %v302
  %v304 = vrot.slane %v165, %v303
  %v305 = vadd.f32 %v299, %v304
  %v306 = vadd.f32 %v300, %v304
  %v307 = vpack.c.bf16 %v306, %v305
  %v309 = vunpack.c.l.b16 %v307
  %v310 = vunpack.c.h.b16 %v307
  %v311 = vpack.c.b16 %v309, %v309
  %v312 = vpack.c.b16 %v310, %v310
  %315 = vst [vmem:[%s8] sm:$0xf] %v311
  %316 = vst [vmem:[%s8 + $0x4] sm:$0x1] %v312
  // Predicated region
  $region34: #{graph_network.10} parent=0 // pred_check
    _
  $region35: #{graph_network.10} parent=0 // pred_check_branch
    %318 = sbr.rel (0) target = $region37
  $region36: #{graph_network.10} parent=0 // pred_region
    _
  $region37: #{graph_network.10} parent=0 // pred_fallthru
    _
  // Predicated region
  $region38: #{graph_network.10} parent=0 // pred_check
    _
  $region39: #{graph_network.10} parent=0 // pred_check_branch
    %320 = sbr.rel (0) target = $region41
  $region40: #{graph_network.10} parent=0 // pred_region
    _
  $region41: #{graph_network.10} parent=0 // pred_fallthru
    _

// kernel: graph_network.11
$region0: #{graph_network.11}
  #allocation0 [shape = 'u32[]', space=smem, size = 0x4, offset = 0x4, fixed_abs, tag = 'smem constant byte address 0x4 - core index']
  #allocation1 [shape = 'u32[144,128]{1,0:T(1,128)}', space=vmem, size = 0x12000, scoped, tag = 'internal scratch']
  %s0 = inlined_call_operand.vmem [shape: f32[12,6], index: 0, kind: input, shape index: {}]
  %s1 = inlined_call_operand.vmem [shape: bf16[12,128], index: 1, kind: input, shape index: {}]
  %s2 = inlined_call_operand.vmem [shape: bf16[12,128], index: 2, kind: input, shape index: {}]
  %s3 = inlined_call_operand.vmem [shape: f32[12,5], index: 3, kind: input, shape index: {}]
  %s4 = inlined_call_operand.vmem [shape: bf16[267,128], index: 4, kind: input, shape index: {}]
  %s5 = inlined_call_operand.vmem [shape: f32[1,128], index: 5, kind: input, shape index: {}]
  %s6 = inlined_call_operand.vmem [shape: bf16[128,128], index: 6, kind: input, shape index: {}]
  %s7 = inlined_call_operand.vmem [shape: f32[3,128], index: 7, kind: input, shape index: {}]
  %s8 = inlined_call_operand.vmem [shape: bf16[12,128], index: 8, kind: output, shape index: {}]
  %s9 = sld [smem:[#allocation0]]
  $region42: #{graph_network.11} parent=0
    _
  %s11 = ssub.s32 1, %s9
  %s12 = scalar_select 0, %s11, %s9
  // Predicated region
  $region2: #{graph_network.11} parent=0 // pred_check
    _
  $region3: #{graph_network.11} parent=0 // pred_check_branch
    %14 = sbr.rel (0) target = $region5
  $region4: #{graph_network.11} parent=0 // pred_region
    _
  $region5: #{graph_network.11} parent=0 // pred_fallthru
    _
  // Predicated region
  $region6: #{graph_network.11} parent=0 // pred_check
    _
  $region7: #{graph_network.11} parent=0 // pred_check_branch
    %16 = sbr.rel (0) target = $region9
  $region8: #{graph_network.11} parent=0 // pred_region
    _
  $region9: #{graph_network.11} parent=0 // pred_fallthru
    _
  // Predicated region
  $region10: #{graph_network.11} parent=0 // pred_check
    _
  $region11: #{graph_network.11} parent=0 // pred_check_branch
    %18 = sbr.rel (0) target = $region13
  $region12: #{graph_network.11} parent=0 // pred_region
    _
  $region13: #{graph_network.11} parent=0 // pred_fallthru
    _
  // Predicated region
  $region14: #{graph_network.11} parent=0 // pred_check
    _
  $region15: #{graph_network.11} parent=0 // pred_check_branch
    %20 = sbr.rel (0) target = $region17
  $region16: #{graph_network.11} parent=0 // pred_region
    _
  $region17: #{graph_network.11} parent=0 // pred_fallthru
    _
  // Predicated region
  $region18: #{graph_network.11} parent=0 // pred_check
    _
  $region19: #{graph_network.11} parent=0 // pred_check_branch
    %22 = sbr.rel (0) target = $region21
  $region20: #{graph_network.11} parent=0 // pred_region
    _
  $region21: #{graph_network.11} parent=0 // pred_fallthru
    _
  // Predicated region
  $region22: #{graph_network.11} parent=0 // pred_check
    _
  $region23: #{graph_network.11} parent=0 // pred_check_branch
    %24 = sbr.rel (0) target = $region25
  $region24: #{graph_network.11} parent=0 // pred_region
    _
  $region25: #{graph_network.11} parent=0 // pred_fallthru
    _
  // Predicated region
  $region26: #{graph_network.11} parent=0 // pred_check
    _
  $region27: #{graph_network.11} parent=0 // pred_check_branch
    %26 = sbr.rel (0) target = $region29
  $region28: #{graph_network.11} parent=0 // pred_region
    _
  $region29: #{graph_network.11} parent=0 // pred_fallthru
    _
  // Predicated region
  $region30: #{graph_network.11} parent=0 // pred_check
    _
  $region31: #{graph_network.11} parent=0 // pred_check_branch
    %28 = sbr.rel (0) target = $region33
  $region32: #{graph_network.11} parent=0 // pred_region
    _
  $region33: #{graph_network.11} parent=0 // pred_fallthru
    _
  %v30 = vld [vmem:[%s0] sm:$0xff]
  %v31 = vld [vmem:[%s0 + $0x8] sm:$0xf]
  %v32 = vld [vmem:[%s1] sm:$0xf]
  %v33 = vld [vmem:[%s1 + $0x4] sm:$0x3]
  %v34 = vunpack.c.l.bf16 %v32
  %v35 = vunpack.c.l.bf16 %v33
  %v36 = vld [vmem:[%s2] sm:$0xf]
  %v37 = vld [vmem:[%s2 + $0x4] sm:$0x3]
  %v38 = vunpack.c.l.bf16 %v36
  %v39 = vunpack.c.l.bf16 %v37
  %v40 = vld [vmem:[%s3] sm:$0xff]
  %v41 = vld [vmem:[%s3 + $0x8] sm:$0xf]
  %44 = vrot.lane.b32.xlu0 %v34, 6
  %v45 = vpop.permute.xlu0 %44
  %46 = vrot.lane.b32.xlu0 %v35, 6
  %v47 = vpop.permute.xlu0 %46
  %52 = vrot.lane.b32.xlu0 %v38, 6
  %v53 = vpop.permute.xlu0 %52
  %54 = vrot.lane.b32.xlu0 %v39, 6
  %v55 = vpop.permute.xlu0 %54
  %60 = vrot.lane.b32.xlu0 %v40, 6
  %v61 = vpop.permute.xlu0 %60
  %62 = vrot.lane.b32.xlu0 %v41, 6
  %v63 = vpop.permute.xlu0 %62
  %vm66 = vcmask 48128
  %v67 = vsel %vm66, %v30, %v45
  %v68 = vsel %vm66, %v31, %v47
  %v69 = vsel %vm66, %v45, %v53
  %v70 = vsel %vm66, %v47, %v55
  %v71 = vsel %vm66, %v53, %v61
  %v72 = vsel %vm66, %v55, %v63
  %v73 = vpack.c.bf16 %v68, %v67
  %v74 = vpack.c.bf16 %v70, %v69
  %v75 = vpack.c.bf16 %v72, %v71
  %v76 = vld [vmem:[%s4] sm:$0xf]
  %v77 = vld [vmem:[%s4 + $0x4] sm:$0xf]
  %v78 = vld [vmem:[%s4 + $0x8] sm:$0xf]
  %v79 = vld [vmem:[%s4 + $0xc] sm:$0xf]
  %v80 = vld [vmem:[%s4 + $0x10] sm:$0xf]
  %v81 = vld [vmem:[%s4 + $0x14] sm:$0xf]
  %v82 = vld [vmem:[%s4 + $0x18] sm:$0xf]
  %v83 = vld [vmem:[%s4 + $0x1c] sm:$0xf]
  %v84 = vld [vmem:[%s4 + $0x20] sm:$0xf]
  %v85 = vld [vmem:[%s4 + $0x24] sm:$0xf]
  %v86 = vld [vmem:[%s4 + $0x28] sm:$0xf]
  %v87 = vld [vmem:[%s4 + $0x2c] sm:$0xf]
  %v88 = vld [vmem:[%s4 + $0x30] sm:$0xf]
  %v89 = vld [vmem:[%s4 + $0x34] sm:$0xf]
  %v90 = vld [vmem:[%s4 + $0x38] sm:$0xf]
  %v91 = vld [vmem:[%s4 + $0x3c] sm:$0xf]
  %v92 = vld [vmem:[%s4 + $0x40] sm:$0xf]
  %v93 = vld [vmem:[%s4 + $0x44] sm:$0xf]
  %v94 = vld [vmem:[%s4 + $0x48] sm:$0xf]
  %v95 = vld [vmem:[%s4 + $0x4c] sm:$0xf]
  %v96 = vld [vmem:[%s4 + $0x50] sm:$0xf]
  %v97 = vld [vmem:[%s4 + $0x54] sm:$0xf]
  %v98 = vld [vmem:[%s4 + $0x58] sm:$0xf]
  %v99 = vld [vmem:[%s4 + $0x5c] sm:$0xf]
  %v100 = vld [vmem:[%s4 + $0x60] sm:$0xf]
  %v101 = vld [vmem:[%s4 + $0x64] sm:$0xf]
  %v102 = vld [vmem:[%s4 + $0x68] sm:$0xf]
  %v103 = vld [vmem:[%s4 + $0x6c] sm:$0xf]
  %v104 = vld [vmem:[%s4 + $0x70] sm:$0xf]
  %v105 = vld [vmem:[%s4 + $0x74] sm:$0xf]
  %v106 = vld [vmem:[%s4 + $0x78] sm:$0xf]
  %v107 = vld [vmem:[%s4 + $0x7c] sm:$0xf]
  %v108 = vld [vmem:[%s4 + $0x80] sm:$0xf]
  %v109 = vld [vmem:[%s4 + $0x84] sm:$0x3]
  %v110 = vld [vmem:[%s5] sm:$0x1]
  %v112 = vlaneseq
  %v113 = vshrl.u32 %v112, 7
  %v114 = vsub.s32 0, %v113
  %v115 = vrot.slane %v110, %v114
  %v151 = vunpack.c.l.b16 %v76
  %v152 = vunpack.c.l.b16 %v77
  %v153 = vunpack.c.l.b16 %v78
  %v154 = vunpack.c.l.b16 %v79
  %v155 = vunpack.c.l.b16 %v80
  %v156 = vunpack.c.l.b16 %v81
  %v157 = vunpack.c.l.b16 %v82
  %v158 = vunpack.c.l.b16 %v83
  %v159 = vunpack.c.l.b16 %v84
  %v160 = vunpack.c.l.b16 %v85
  %v161 = vunpack.c.l.b16 %v86
  %v162 = vunpack.c.l.b16 %v87
  %v163 = vunpack.c.l.b16 %v88
  %v164 = vunpack.c.l.b16 %v89
  %v165 = vunpack.c.l.b16 %v90
  %v166 = vunpack.c.l.b16 %v91
  %v167 = vunpack.c.l.b16 %v92
  %v168 = vunpack.c.l.b16 %v93
  %v169 = vunpack.c.l.b16 %v94
  %v170 = vunpack.c.l.b16 %v95
  %v171 = vunpack.c.l.b16 %v96
  %v172 = vunpack.c.l.b16 %v97
  %v173 = vunpack.c.l.b16 %v98
  %v174 = vunpack.c.l.b16 %v99
  %v175 = vunpack.c.l.b16 %v100
  %v176 = vunpack.c.l.b16 %v101
  %v177 = vunpack.c.l.b16 %v102
  %v178 = vunpack.c.l.b16 %v103
  %v179 = vunpack.c.l.b16 %v104
  %v180 = vunpack.c.l.b16 %v105
  %v181 = vunpack.c.l.b16 %v106
  %v182 = vunpack.c.l.b16 %v107
  %v183 = vunpack.c.l.b16 %v108
  %v184 = vunpack.c.l.b16 %v109
  %v185 = vpack.c.b16 %v152, %v151
  %v186 = vpack.c.b16 %v154, %v153
  %v187 = vpack.c.b16 %v156, %v155
  %v188 = vpack.c.b16 %v158, %v157
  %v189 = vpack.c.b16 %v160, %v159
  %v190 = vpack.c.b16 %v162, %v161
  %v191 = vpack.c.b16 %v164, %v163
  %v192 = vpack.c.b16 %v166, %v165
  %v193 = vpack.c.b16 %v168, %v167
  %v194 = vpack.c.b16 %v170, %v169
  %v195 = vpack.c.b16 %v172, %v171
  %v196 = vpack.c.b16 %v174, %v173
  %v197 = vpack.c.b16 %v176, %v175
  %v198 = vpack.c.b16 %v178, %v177
  %v199 = vpack.c.b16 %v180, %v179
  %v200 = vpack.c.b16 %v182, %v181
  %v201 = vpack.c.b16 %v184, %v183
  %vm218 = vcmask 89088
  %v220 = vsel %vm218, %v75, 0
  %vm222 = vcmask 1044480
  %vm223 = vcmask 1045504
  %v224 = vsel %vm222, 4294967295, 65535
  %v225 = vsel %vm223, %v224, 0
  %v227 = vand.u32 %v201, %v225
  %229 = vmatprep.subr.bf16.mxu0 0
  %230 = vmatpush1.bf16.msra.mxu0 %v192
  %231 = vmatprep.subr.bf16.mxu0 0
  %232 = vmatpush1.bf16.msra.mxu0 %v191
  %233 = vmatprep.subr.bf16.mxu0 0
  %234 = vmatpush1.bf16.msra.mxu0 %v190
  %235 = vmatprep.subr.bf16.mxu0 0
  %236 = vmatpush1.bf16.msra.mxu0 %v189
  %237 = vmatprep.subr.bf16.mxu0 0
  %238 = vmatpush1.bf16.msra.mxu0 %v188
  %239 = vmatprep.subr.bf16.mxu0 0
  %240 = vmatpush1.bf16.msra.mxu0 %v187
  %241 = vmatprep.subr.bf16.mxu0 0
  %242 = vmatpush1.bf16.msra.mxu0 %v186
  %243 = vmatprep.subr.bf16.mxu0 0
  %244 = vmatpush1.bf16.msra.mxu0 %v185
  %245 = vmatprep.subr.bf16.mxu0 0
  %246 = vmatpush2.bf16.msra.mxu0 %v200
  %247 = vmatprep.subr.bf16.mxu0 0
  %248 = vmatpush2.bf16.msra.mxu0 %v199
  %249 = vmatprep.subr.bf16.mxu0 0
  %250 = vmatpush2.bf16.msra.mxu0 %v198
  %251 = vmatprep.subr.bf16.mxu0 0
  %252 = vmatpush2.bf16.msra.mxu0 %v197
  %253 = vmatprep.subr.bf16.mxu0 0
  %254 = vmatpush2.bf16.msra.mxu0 %v196
  %255 = vmatprep.subr.bf16.mxu0 0
  %256 = vmatpush2.bf16.msra.mxu0 %v195
  %257 = vmatprep.subr.bf16.mxu0 0
  %258 = vmatpush2.bf16.msra.mxu0 %v194
  %259 = vmatprep.subr.bf16.mxu0 0
  %260 = vmatpush2.bf16.msra.mxu0 %v193
  %261 = vmatprep.mubr.bf16.mxu0 %v74
  %262 = vmatmul.mubr.bf16.gmra.mxu0 %v73
  %v263 = vpop.f32.mrf.mxu0
  %v264 = vadd.f32 %v115, %v263
  %v265 = vpop.f32.mrf.mxu0
  %v266 = vpop.f32.mrf.mxu0
  %v267 = vadd.f32 %v115, %v266
  %v268 = vpop.f32.mrf.mxu0
  %269 = vdwg.mxu0
  %270 = vmatprep.subr.bf16.mxu0 0
  %271 = vmatpush1.bf16.msra.mxu0 0
  %272 = vmatprep.subr.bf16.mxu0 0
  %273 = vmatpush1.bf16.msra.mxu0 0
  %274 = vmatprep.subr.bf16.mxu0 0
  %275 = vmatpush1.bf16.msra.mxu0 0
  %276 = vmatprep.subr.bf16.mxu0 0
  %277 = vmatpush1.bf16.msra.mxu0 0
  %278 = vmatprep.subr.bf16.mxu0 0
  %279 = vmatpush1.bf16.msra.mxu0 0
  %280 = vmatprep.subr.bf16.mxu0 0
  %281 = vmatpush1.bf16.msra.mxu0 0
  %282 = vmatprep.subr.bf16.mxu0 0
  %283 = vmatpush1.bf16.msra.mxu0 0
  %284 = vmatprep.subr.bf16.mxu0 0
  %285 = vmatpush1.bf16.msra.mxu0 %v227
  %286 = vmatprep.subr.bf16.mxu0 0
  %287 = vmatpush2.bf16.msra.mxu0 0
  %288 = vmatprep.subr.bf16.mxu0 0
  %289 = vmatpush2.bf16.msra.mxu0 0
  %290 = vmatprep.subr.bf16.mxu0 0
  %291 = vmatpush2.bf16.msra.mxu0 0
  %292 = vmatprep.subr.bf16.mxu0 0
  %293 = vmatpush2.bf16.msra.mxu0 0
  %294 = vmatprep.subr.bf16.mxu0 0
  %295 = vmatpush2.bf16.msra.mxu0 0
  %296 = vmatprep.subr.bf16.mxu0 0
  %297 = vmatpush2.bf16.msra.mxu0 0
  %298 = vmatprep.subr.bf16.mxu0 0
  %299 = vmatpush2.bf16.msra.mxu0 0
  %300 = vmatprep.subr.bf16.mxu0 0
  %301 = vmatpush2.bf16.msra.mxu0 0
  %302 = vmatprep.mubr.bf16.mxu0 0
  %303 = vmatmul.mubr.bf16.gmra.mxu0 %v220
  %v304 = vpop.f32.mrf.mxu0
  %v305 = vadd.f32 %v264, %v304
  %v306 = vpop.f32.mrf.mxu0
  %v307 = vpop.f32.mrf.mxu0
  %v308 = vadd.f32 %v267, %v307
  %v309 = vpop.f32.mrf.mxu0
  %310 = vdwg.mxu0
  %v311 = vmax.f32 %v305, 0.0
  %v312 = vmax.f32 %v308, 0.0
  %v313 = vpack.c.bf16 %v312, %v311
  %v314 = vld [vmem:[%s6] sm:$0xf]
  %v315 = vld [vmem:[%s6 + $0x4] sm:$0xf]
  %v316 = vld [vmem:[%s6 + $0x8] sm:$0xf]
  %v317 = vld [vmem:[%s6 + $0xc] sm:$0xf]
  %v318 = vld [vmem:[%s6 + $0x10] sm:$0xf]
  %v319 = vld [vmem:[%s6 + $0x14] sm:$0xf]
  %v320 = vld [vmem:[%s6 + $0x18] sm:$0xf]
  %v321 = vld [vmem:[%s6 + $0x1c] sm:$0xf]
  %v322 = vld [vmem:[%s6 + $0x20] sm:$0xf]
  %v323 = vld [vmem:[%s6 + $0x24] sm:$0xf]
  %v324 = vld [vmem:[%s6 + $0x28] sm:$0xf]
  %v325 = vld [vmem:[%s6 + $0x2c] sm:$0xf]
  %v326 = vld [vmem:[%s6 + $0x30] sm:$0xf]
  %v327 = vld [vmem:[%s6 + $0x34] sm:$0xf]
  %v328 = vld [vmem:[%s6 + $0x38] sm:$0xf]
  %v329 = vld [vmem:[%s6 + $0x3c] sm:$0xf]
  %v330 = vld [vmem:[%s7] sm:$0x7]
  %v331 = vlaneseq
  %v332 = vshrl.u32 %v331, 7
  %v333 = vsub.s32 0, %v332
  %v334 = vrot.slane %v330, %v333
  %v351 = vunpack.c.l.b16 %v314
  %v352 = vunpack.c.l.b16 %v315
  %v353 = vunpack.c.l.b16 %v316
  %v354 = vunpack.c.l.b16 %v317
  %v355 = vunpack.c.l.b16 %v318
  %v356 = vunpack.c.l.b16 %v319
  %v357 = vunpack.c.l.b16 %v320
  %v358 = vunpack.c.l.b16 %v321
  %v359 = vunpack.c.l.b16 %v322
  %v360 = vunpack.c.l.b16 %v323
  %v361 = vunpack.c.l.b16 %v324
  %v362 = vunpack.c.l.b16 %v325
  %v363 = vunpack.c.l.b16 %v326
  %v364 = vunpack.c.l.b16 %v327
  %v365 = vunpack.c.l.b16 %v328
  %v366 = vunpack.c.l.b16 %v329
  %v367 = vpack.c.b16 %v352, %v351
  %v368 = vpack.c.b16 %v354, %v353
  %v369 = vpack.c.b16 %v356, %v355
  %v370 = vpack.c.b16 %v358, %v357
  %v371 = vpack.c.b16 %v360, %v359
  %v372 = vpack.c.b16 %v362, %v361
  %v373 = vpack.c.b16 %v364, %v363
  %v374 = vpack.c.b16 %v366, %v365
  %383 = vmatprep.subr.bf16.mxu0 0
  %384 = vmatpush1.bf16.msra.mxu0 %v374
  %385 = vmatprep.subr.bf16.mxu0 0
  %386 = vmatpush1.bf16.msra.mxu0 %v373
  %387 = vmatprep.subr.bf16.mxu0 0
  %388 = vmatpush1.bf16.msra.mxu0 %v372
  %389 = vmatprep.subr.bf16.mxu0 0
  %390 = vmatpush1.bf16.msra.mxu0 %v371
  %391 = vmatprep.subr.bf16.mxu0 0
  %392 = vmatpush1.bf16.msra.mxu0 %v370
  %393 = vmatprep.subr.bf16.mxu0 0
  %394 = vmatpush1.bf16.msra.mxu0 %v369
  %395 = vmatprep.subr.bf16.mxu0 0
  %396 = vmatpush1.bf16.msra.mxu0 %v368
  %397 = vmatprep.subr.bf16.mxu0 0
  %398 = vmatpush1.bf16.msra.mxu0 %v367
  %399 = vmatprep.subr.bf16.mxu0 0
  %400 = vmatpush2.bf16.msra.mxu0 0
  %401 = vmatprep.subr.bf16.mxu0 0
  %402 = vmatpush2.bf16.msra.mxu0 0
  %403 = vmatprep.subr.bf16.mxu0 0
  %404 = vmatpush2.bf16.msra.mxu0 0
  %405 = vmatprep.subr.bf16.mxu0 0
  %406 = vmatpush2.bf16.msra.mxu0 0
  %407 = vmatprep.subr.bf16.mxu0 0
  %408 = vmatpush2.bf16.msra.mxu0 0
  %409 = vmatprep.subr.bf16.mxu0 0
  %410 = vmatpush2.bf16.msra.mxu0 0
  %411 = vmatprep.subr.bf16.mxu0 0
  %412 = vmatpush2.bf16.msra.mxu0 0
  %413 = vmatprep.subr.bf16.mxu0 0
  %414 = vmatpush2.bf16.msra.mxu0 0
  %415 = vmatprep.mubr.bf16.mxu0 0
  %416 = vmatmul.mubr.bf16.gmra.mxu0 %v313
  %v417 = vpop.f32.mrf.mxu0
  %v418 = vadd.f32 %v334, %v417
  %v419 = vpop.f32.mrf.mxu0
  %v420 = vpop.f32.mrf.mxu0
  %v421 = vadd.f32 %v334, %v420
  %v422 = vpop.f32.mrf.mxu0
  %423 = vdwg.mxu0
  %v424 = vmax.f32 %v418, 0.0
  %v425 = vmax.f32 %v421, 0.0
  %v426 = vlaneseq
  %v427 = vand.u32 %v426, 127
  %vm428 = vcmp.lt.s32.totalorder %v427, 12
  %v429 = vsel %vm428, 1, 0
  %v430 = vcvt.s32.f32 %v429
  %v431 = vmul.f32 %v424, %v430
  %v432 = vmul.f32 %v425, %v430
  %433 = vadd.xlane.f32.xlu0 %v431
  %v434 = vpop.xlane.xlu0 %433
  %vm435 = vcmask 1043456
  %v436 = vsel %vm435, %v432, 0.0
  %437 = vadd.xlane.f32.xlu0 %v436
  %v438 = vpop.xlane.xlu0 %437
  %v439 = vmul.f32 %v434, 0.083333336
  %v440 = vmul.f32 %v438, 0.083333336
  %v441 = vsub.f32 %v424, %v439
  %v442 = vsub.f32 %v425, %v440
  %v443 = vmul.f32 %v441, %v430
  %v444 = vmul.f32 %v442, %v430
  %v445 = vmul.f32 %v443, %v443
  %v446 = vmul.f32 %v444, %v444
  %447 = vadd.xlane.f32.xlu0 %v445
  %v448 = vpop.xlane.xlu0 %447
  %v449 = vsel %vm435, %v446, 0.0
  %450 = vadd.xlane.f32.xlu0 %v449
  %v451 = vpop.xlane.xlu0 %450
  %v452 = vmul.f32 %v448, 0.083333336
  %v453 = vmul.f32 %v451, 0.083333336
  %v454 = vadd.f32 %v452, 1e-05
  %v455 = vadd.f32 %v453, 1e-05
  %v456 = vrsqrt.pop %v454
  %v457 = vrsqrt.pop %v455
  %v458 = vmul.f32 %v443, %v456
  %v459 = vmul.f32 %v444, %v457
  %v460 = vlaneseq
  %v461 = vshrl.u32 %v460, 7
  %v462 = vsub.s32 1, %v461
  %v463 = vrot.slane %v330, %v462
  %v464 = vmul.f32 %v458, %v463
  %v465 = vmul.f32 %v459, %v463
  %v466 = vlaneseq
  %v467 = vshrl.u32 %v466, 7
  %v468 = vsub.s32 2, %v467
  %v469 = vrot.slane %v330, %v468
  %v470 = vadd.f32 %v464, %v469
  %v471 = vadd.f32 %v465, %v469
  %v472 = vpack.c.bf16 %v471, %v470
  %v474 = vunpack.c.l.b16 %v472
  %v475 = vunpack.c.h.b16 %v472
  %v476 = vpack.c.b16 %v474, %v474
  %v477 = vpack.c.b16 %v475, %v475
  %480 = vst [vmem:[%s8] sm:$0xf] %v476
  %481 = vst [vmem:[%s8 + $0x4] sm:$0x3] %v477
  // Predicated region
  $region34: #{graph_network.11} parent=0 // pred_check
    _
  $region35: #{graph_network.11} parent=0 // pred_check_branch
    %483 = sbr.rel (0) target = $region37
  $region36: #{graph_network.11} parent=0 // pred_region
    _
  $region37: #{graph_network.11} parent=0 // pred_fallthru
    _
  // Predicated region
  $region38: #{graph_network.11} parent=0 // pred_check
    _
  $region39: #{graph_network.11} parent=0 // pred_check_branch
    %485 = sbr.rel (0) target = $region41
  $region40: #{graph_network.11} parent=0 // pred_region
    _
  $region41: #{graph_network.11} parent=0 // pred_fallthru
    _

</llo_original>
